<compile_context>
chip_gen: v7x
topology: tpu7x:2x2x1
jax: 0.10.0
libtpu: 0.0.40
codegen_flags: <defaults>
</compile_context>

<pallas_src>
import functools

import jax
import jax.numpy as jnp
from jax import lax
from jax.experimental import pallas as pl
from jax.experimental.pallas import tpu as pltpu


# ---------------------------------------------------------------------------
# Fused Fire kernel: squeeze(1x1) -> combined [expand1 | expand3] im2col matmul
# ---------------------------------------------------------------------------
def _fire_fused_kernel(x_top_ref, x_mid_ref, x_bot_ref,
                       w_sq_ref, b_sq_ref,
                       w_ex_ref, b_ex_ref,
                       o_ref, sq_pad_ref, *, img_h):
    # x_mid : (1, TH, W, Cin)   rows [r*TH, r*TH+TH) of this image
    # x_top : (1, 1,  W, Cin)   row  r*TH - 1   (clamped at the top border)
    # x_bot : (1, 1,  W, Cin)   row  r*TH + TH  (clamped at the bottom border)
    # w_sq  : (Cin, S)   bf16   b_sq: (1, S)  f32
    # w_ex  : (9*S, E)   bf16   b_ex: (1, E)  f32   (E = E1 + E3; E1 columns
    #         live only in the centre-tap rows 4*S..5*S, E3 columns are the
    #         full 3x3 im2col weight in (kh, kw, cin) row order)
    # o     : (1, TH, W, E) bf16/f32
    # sq_pad: (TH+2, W+2, S) f32 VMEM scratch: zero-padded squeeze activation
    TH, W, Cin = x_mid_ref.shape[1], x_mid_ref.shape[2], x_mid_ref.shape[3]
    S = w_sq_ref.shape[1]
    E = w_ex_ref.shape[1]

    r = pl.program_id(1)
    nr = pl.num_programs(1)

    w_sq = w_sq_ref[...]
    b_sq = b_sq_ref[...]

    # ---- squeeze (1x1 conv + ReLU) of the TH interior rows -> scratch 1..TH
    x_mid = x_mid_ref[...].reshape(TH * W, Cin).astype(jnp.bfloat16)
    sq_mid = jnp.dot(x_mid, w_sq, preferred_element_type=jnp.float32)
    sq_mid = jnp.maximum(sq_mid + b_sq, 0.0)
    sq_pad_ref[pl.ds(1, TH), pl.ds(1, W), :] = sq_mid.reshape(TH, W, S)

    # ---- squeeze of the two 1-row halos -> scratch rows 0 and TH+1
    x_halo = jnp.concatenate([x_top_ref[...], x_bot_ref[...]], axis=1)
    x_halo = x_halo.reshape(2 * W, Cin).astype(jnp.bfloat16)
    sq_halo = jnp.dot(x_halo, w_sq, preferred_element_type=jnp.float32)
    sq_halo = jnp.maximum(sq_halo + b_sq, 0.0).reshape(2, W, S)
    sq_pad_ref[pl.ds(0, 1), pl.ds(1, W), :] = sq_halo[0:1]
    sq_pad_ref[pl.ds(TH + 1, 1), pl.ds(1, W), :] = sq_halo[1:2]

    # ---- zero-padding maintenance (only what the 3x3 conv actually reads).
    # The scratch persists across grid steps (per core), and nothing above
    # writes the left/right pad columns -> re-zero just those two columns.
    zero_col = jnp.zeros((TH + 2, 1, S), jnp.float32)
    sq_pad_ref[:, pl.ds(0, 1), :] = zero_col
    sq_pad_ref[:, pl.ds(W + 1, 1), :] = zero_col

    zero_row = jnp.zeros((1, W + 2, S), jnp.float32)

    @pl.when(r == 0)                       # above the image
    def _():
        sq_pad_ref[pl.ds(0, 1), :, :] = zero_row

    # Below-image pad row.  For a ragged tail tile only `valid` rows are real
    # image rows, so the pad row sits at scratch row valid+1 (dynamic index);
    # for the divisible case it is the static row TH+1.
    if img_h % TH == 0:
        bot_pad = TH + 1
    else:
        bot_pad = jnp.minimum(TH, img_h - r * TH) + 1

    @pl.when(r == nr - 1)                  # below the image
    def _():
        sq_pad_ref[pl.ds(bot_pad, 1), :, :] = zero_row

    # ---- expand1 + expand3 + concat as ONE im2col matmul (K = 9*S, N = E).
    cols = []
    for dy in range(3):
        for dx in range(3):
            cols.append(sq_pad_ref[pl.ds(dy, TH), pl.ds(dx, W), :])
    patch = jnp.concatenate(cols, axis=-1)                  # (TH, W, 9*S)
    patch = patch.reshape(TH * W, 9 * S).astype(jnp.bfloat16)
    ex = jnp.dot(patch, w_ex_ref[...], preferred_element_type=jnp.float32)
    ex = jnp.maximum(ex + b_ex_ref[...], 0.0)

    # single lane-dense store of the fused (e1 | e3) output tile
    o_ref[...] = ex.reshape(1, TH, W, E).astype(o_ref.dtype)


# ---------------------------------------------------------------------------
# VMEM accounting (lane/sublane-padded) and generation-aware budgets
# ---------------------------------------------------------------------------
def _round_up(x, m):
    return -(-x // m) * m


def _tile_bytes(leading, sub, lane, itemsize):
    """Physical VMEM bytes of a (leading..., sub, lane) tile with (8,128)
    f32 / (16,128) bf16 tiling applied to the last two dims."""
    sub_mult = 8 * (4 // itemsize) if itemsize < 4 else 8
    return leading * _round_up(sub, sub_mult) * _round_up(lane, 128) * itemsize


def _per_step_vmem_bytes(TH, W, Cin, S, E, x_itemsize, out_itemsize):
    K9 = 9 * S
    blocks = (_tile_bytes(TH, W, Cin, x_itemsize)          # x interior tile
              + 2 * _tile_bytes(1, W, Cin, x_itemsize)     # top/bottom halos
              + _tile_bytes(TH, W, E, out_itemsize)        # fused output tile
              + _tile_bytes(1, Cin, S, 2)                  # squeeze weight
              + _tile_bytes(1, K9, E, 2)                   # combined weight
              + _tile_bytes(1, 1, S, 4)
              + _tile_bytes(1, 1, E, 4))
    scratch = _tile_bytes(TH + 2, W + 2, S, 4)
    # rough allowance for in-kernel temporaries (im2col patch, f32 matmul
    # results) the compiler materialises in VMEM
    temps = TH * W * (_round_up(K9, 128) * 2
                      + _round_up(E, 128) * 4
                      + _round_up(S, 128) * 4)
    return 2 * blocks + scratch + temps      # inputs/outputs double-buffered


def _vmem_budgets():
    """(per-step tile budget, vmem_limit_bytes) derived from the chip:
    v5e/v6e (128 MiB) -> ~48 / 96 MiB, v7x (64 MiB) -> ~24 / 48 MiB."""
    try:
        cap = int(getattr(pltpu.get_tpu_info(), "vmem_capacity_bytes", 0))
    except Exception:
        cap = 0
    if cap <= 0:
        cap = 64 * 2**20                    # conservative (v7x-sized) default
    tile_budget = (cap * 3) // 8
    vmem_limit = min((cap * 3) // 4, 96 * 2**20)
    return tile_budget, vmem_limit


def _pick_row_tile(H, W, Cin, S, E, x_itemsize, out_itemsize, budget):
    """Largest row tile TH <= H whose padded, double-buffered per-step
    footprint fits the budget.  H need not be divisible by TH (the kernel
    masks the ragged tail tile)."""
    best = 1
    for th in range(1, H + 1):
        if _per_step_vmem_bytes(th, W, Cin, S, E,
                                x_itemsize, out_itemsize) <= budget:
            best = th
    return best


# ---------------------------------------------------------------------------
# Wrapper
# ---------------------------------------------------------------------------
def fire_fused(x_nhwc, params, out_dtype=jnp.bfloat16):
    """Fused Fire forward in NHWC. Returns (N, H, W, e1_ch + e3_ch)."""
    N, H, W, Cin = x_nhwc.shape
    w_sq = params["w_sq_bf16"]
    w_ex = params["w_ex_bf16"]
    S = w_sq.shape[1]
    E = w_ex.shape[1]

    tile_budget, vmem_limit = _vmem_budgets()
    TH = _pick_row_tile(H, W, Cin, S, E,
                        x_nhwc.dtype.itemsize, jnp.dtype(out_dtype).itemsize,
                        tile_budget)
    nr = pl.cdiv(H, TH)
    # TODO(synk): for very small late-stage maps (13x13) also block over
    # several batch images per grid step to raise matmul M further.

    grid_spec = pltpu.PrefetchScalarGridSpec(
        num_scalar_prefetch=0,
        grid=(N, nr),
        in_specs=[
            # top halo row: r*TH - 1 (clamped; zeroed in-kernel when r == 0)
            pl.BlockSpec((1, 1, W, Cin),
                         lambda n, r: (n, jnp.maximum(r * TH - 1, 0), 0, 0)),
            # the TH rows this grid step produces
            pl.BlockSpec((1, TH, W, Cin), lambda n, r: (n, r, 0, 0)),
            # bottom halo row: r*TH + TH (clamped; zeroed when r == nr - 1)
            pl.BlockSpec((1, 1, W, Cin),
                         lambda n, r: (n, jnp.minimum(r * TH + TH, H - 1), 0, 0)),
            # weights / biases: constant block index -> stay VMEM-resident
            pl.BlockSpec((Cin, S), lambda n, r: (0, 0)),
            pl.BlockSpec((1, S), lambda n, r: (0, 0)),
            pl.BlockSpec((9 * S, E), lambda n, r: (0, 0)),
            pl.BlockSpec((1, E), lambda n, r: (0, 0)),
        ],
        out_specs=pl.BlockSpec((1, TH, W, E), lambda n, r: (n, r, 0, 0)),
        scratch_shapes=[pltpu.VMEM((TH + 2, W + 2, S), jnp.float32)],
    )

    kernel = functools.partial(_fire_fused_kernel, img_h=H)

    return pl.pallas_call(
        kernel,
        out_shape=jax.ShapeDtypeStruct((N, H, W, E), out_dtype),
        grid_spec=grid_spec,
        compiler_params=pltpu.CompilerParams(
            dimension_semantics=("parallel", "parallel"),
            vmem_limit_bytes=vmem_limit),
    )(x_nhwc, x_nhwc, x_nhwc,
      w_sq, params["b_sq"].reshape(1, S).astype(jnp.float32),
      w_ex, params["b_ex"].reshape(1, E).astype(jnp.float32))


def fire_forward(params, x_nchw, out_dtype=jnp.bfloat16):
    """Matches torch Fire.forward: NCHW in, NCHW out."""
    # TODO(synk): keep activations NHWC end-to-end across the network to drop
    # these two full-tensor transposes; they remain only to preserve the
    # module's NCHW (PyTorch) interface.
    x = jnp.transpose(x_nchw, (0, 2, 3, 1))        # NCHW -> NHWC
    out = fire_fused(x, params, out_dtype=out_dtype)
    return jnp.transpose(out, (0, 3, 1, 2))        # NHWC -> NCHW


# ---------------------------------------------------------------------------
# Parameters (PyTorch layouts, pre-transposed / pre-combined for the kernel)
# ---------------------------------------------------------------------------
def init_fire_params(key, in_ch, squeeze_ch, e1_ch, e3_ch):
    ks = jax.random.split(key, 6)
    scale = 0.1
    # torch Conv2d 1x1 weight (out, in, 1, 1) -> matmul form (in, out)
    w_sq = scale * jax.random.normal(ks[0], (in_ch, squeeze_ch), jnp.float32)
    b_sq = scale * jax.random.normal(ks[1], (squeeze_ch,), jnp.float32)
    w_e1 = scale * jax.random.normal(ks[2], (squeeze_ch, e1_ch), jnp.float32)
    b_e1 = scale * jax.random.normal(ks[3], (e1_ch,), jnp.float32)
    # torch 3x3 weight (out, in, 3, 3) -> im2col rows ordered (kh, kw, in)
    w_e3_torch = scale * jax.random.normal(ks[4], (e3_ch, squeeze_ch, 3, 3),
                                           jnp.float32)
    b_e3 = scale * jax.random.normal(ks[5], (e3_ch,), jnp.float32)
    w_e3_mat = jnp.transpose(w_e3_torch, (2, 3, 1, 0)).reshape(
        9 * squeeze_ch, e3_ch)

    # Combined expand weight: expand1 folded into the centre tap (kh=kw=1,
    # im2col rows 4*S..5*S); expand3 occupies the remaining columns.
    w_ex = jnp.zeros((9 * squeeze_ch, e1_ch + e3_ch), jnp.float32)
    w_ex = w_ex.at[4 * squeeze_ch:5 * squeeze_ch, :e1_ch].set(w_e1)
    w_ex = w_ex.at[:, e1_ch:].set(w_e3_mat)
    b_ex = jnp.concatenate([b_e1, b_e3])

    return dict(
        w_sq=w_sq, b_sq=b_sq, w_e1=w_e1, b_e1=b_e1,
        w_e3_torch=w_e3_torch, b_e3=b_e3, b_ex=b_ex,
        # bf16 copies fed to the MXU (accumulation stays f32 in-kernel)
        w_sq_bf16=w_sq.astype(jnp.bfloat16),
        w_ex_bf16=w_ex.astype(jnp.bfloat16),
    )


# ---------------------------------------------------------------------------
# Pure-JAX f32 reference (for correctness check)
# ---------------------------------------------------------------------------
def fire_reference(params, x_nchw):
    dn = ("NCHW", "OIHW", "NCHW")
    w_sq = jnp.transpose(params["w_sq"], (1, 0))[:, :, None, None]
    w_e1 = jnp.transpose(params["w_e1"], (1, 0))[:, :, None, None]
    w_e3 = params["w_e3_torch"]

    def conv(x, w, b, pad):
        y = lax.conv_general_dilated(x, w, (1, 1),
                                     [(pad, pad), (pad, pad)],
                                     dimension_numbers=dn,
                                     precision=lax.Precision.HIGHEST)
        return jnp.maximum(y + b[None, :, None, None], 0.0)

    sq = conv(x_nchw, w_sq, params["b_sq"], 0)
    e1 = conv(sq, w_e1, params["b_e1"], 0)
    e3 = conv(sq, w_e3, params["b_e3"], 1)
    return jnp.concatenate([e1, e3], axis=1)


# ---------------------------------------------------------------------------
if __name__ == "__main__":
    key = jax.random.PRNGKey(0)
    k_x, k_p = jax.random.split(key)

    # Small demo shapes; e1_ch + e3_ch = 128 -> lane-dense fused output store.
    N, in_ch, H, W = 2, 32, 16, 16
    squeeze_ch, e1_ch, e3_ch = 16, 64, 64

    x = jax.random.normal(k_x, (N, in_ch, H, W), jnp.float32)
    params = init_fire_params(k_p, in_ch, squeeze_ch, e1_ch, e3_ch)

    out = jax.block_until_ready(jax.jit(fire_forward)(params, x))
    ref = jax.block_until_ready(fire_reference(params, x))

    assert out.shape == (N, e1_ch + e3_ch, H, W), out.shape
    out_f32 = out.astype(jnp.float32)
    max_err = float(jnp.max(jnp.abs(out_f32 - ref)))
    # bf16 MXU operands + bf16 output with f32 accumulation -> loose tolerance.
    assert jnp.allclose(out_f32, ref, atol=5e-2, rtol=5e-2), (
        f"mismatch vs reference: max |diff| = {max_err}")
    print("KERNEL_OK")
</pallas_src>

<mosaic_0001>
module attributes {stable_mosaic.version = 11 : i64} {
  func.func @_fire_fused_kernel(%arg0: i32, %arg1: i32, %arg2: memref<1x1x16x32xf32, #tpu.memory_space<vmem>>, %arg3: memref<1x16x16x32xf32, #tpu.memory_space<vmem>>, %arg4: memref<1x1x16x32xf32, #tpu.memory_space<vmem>>, %arg5: memref<32x16xbf16, #tpu.memory_space<vmem>>, %arg6: memref<1x16xf32, #tpu.memory_space<vmem>>, %arg7: memref<144x128xbf16, #tpu.memory_space<vmem>>, %arg8: memref<1x128xf32, #tpu.memory_space<vmem>>, %arg9: memref<1x16x16x128xbf16, #tpu.memory_space<vmem>>, %arg10: memref<18x18x16xf32, #tpu.memory_space<vmem>>) attributes {dimension_semantics = [#tpu.dimension_semantics<parallel>, #tpu.dimension_semantics<parallel>], iteration_bounds = array<i64: 2, 1>, scalar_prefetch = 0 : i64, scratch_operands = 1 : i64, tpu.core_type = #tpu.core_type<tc>, window_params = [{transform_indices = @transform_0, window_bounds = array<i64: 1, 1, 16, 32>}, {transform_indices = @transform_1, window_bounds = array<i64: 1, 16, 16, 32>}, {transform_indices = @transform_2, window_bounds = array<i64: 1, 1, 16, 32>}, {pipeline_mode = #tpu.pipeline_mode<synchronous>, transform_indices = @transform_3, window_bounds = array<i64: 32, 16>}, {pipeline_mode = #tpu.pipeline_mode<synchronous>, transform_indices = @transform_4, window_bounds = array<i64: 1, 16>}, {pipeline_mode = #tpu.pipeline_mode<synchronous>, transform_indices = @transform_5, window_bounds = array<i64: 144, 128>}, {pipeline_mode = #tpu.pipeline_mode<synchronous>, transform_indices = @transform_6, window_bounds = array<i64: 1, 128>}, {transform_indices = @transform_7, window_bounds = array<i64: 1, 16, 16, 128>}]} {
    %c0 = arith.constant 0 : index
    %c0_0 = arith.constant 0 : index
    %0 = vector.load %arg5[%c0, %c0_0] : memref<32x16xbf16, #tpu.memory_space<vmem>>, vector<32x16xbf16>
    %c0_1 = arith.constant 0 : index
    %c0_2 = arith.constant 0 : index
    %1 = vector.load %arg6[%c0_1, %c0_2] : memref<1x16xf32, #tpu.memory_space<vmem>>, vector<1x16xf32>
    %c0_3 = arith.constant 0 : index
    %c0_4 = arith.constant 0 : index
    %c0_5 = arith.constant 0 : index
    %c0_6 = arith.constant 0 : index
    %2 = vector.load %arg3[%c0_3, %c0_4, %c0_5, %c0_6] : memref<1x16x16x32xf32, #tpu.memory_space<vmem>>, vector<1x16x16x32xf32>
    %3 = vector.shape_cast %2 : vector<1x16x16x32xf32> to vector<256x32xf32>
    %4 = arith.truncf %3 : vector<256x32xf32> to vector<256x32xbf16>
    %cst = arith.constant dense<0.000000e+00> : vector<256x16xf32>
    %5 = tpu.matmul %4, %0, %cst {dimension_numbers = #tpu.dot_dimension_numbers<[1], [0], [0], [1], [0, 0, 1, 1], [], []>} : vector<256x32xbf16>, vector<32x16xbf16>, vector<256x16xf32> -> vector<256x16xf32>
    %6 = vector.broadcast %1 : vector<1x16xf32> to vector<256x16xf32>
    %7 = arith.addf %5, %6 : vector<256x16xf32>
    %cst_7 = arith.constant 0.000000e+00 : f32
    %8 = vector.broadcast %cst_7 : f32 to vector<256x16xf32>
    %9 = arith.maximumf %7, %8 : vector<256x16xf32>
    %10 = vector.shape_cast %9 : vector<256x16xf32> to vector<16x16x16xf32>
    %c1 = arith.constant 1 : index
    %c1_8 = arith.constant 1 : index
    %c0_9 = arith.constant 0 : index
    %11 = vector.load %arg10[%c1, %c1_8, %c0_9] : memref<18x18x16xf32, #tpu.memory_space<vmem>>, vector<16x16x16xf32>
    tpu.vector_store %arg10[%c1, %c1_8, %c0_9], %10 {strides = array<i32>} : memref<18x18x16xf32, #tpu.memory_space<vmem>>, vector<16x16x16xf32>,
    %c0_10 = arith.constant 0 : index
    %c0_11 = arith.constant 0 : index
    %c0_12 = arith.constant 0 : index
    %c0_13 = arith.constant 0 : index
    %12 = vector.load %arg2[%c0_10, %c0_11, %c0_12, %c0_13] : memref<1x1x16x32xf32, #tpu.memory_space<vmem>>, vector<1x1x16x32xf32>
    %c0_14 = arith.constant 0 : index
    %c0_15 = arith.constant 0 : index
    %c0_16 = arith.constant 0 : index
    %c0_17 = arith.constant 0 : index
    %13 = vector.load %arg4[%c0_14, %c0_15, %c0_16, %c0_17] : memref<1x1x16x32xf32, #tpu.memory_space<vmem>>, vector<1x1x16x32xf32>
    %14 = tpu.concatenate %12, %13 in 1 : vector<1x1x16x32xf32>, vector<1x1x16x32xf32> -> vector<1x2x16x32xf32>
    %15 = vector.shape_cast %14 : vector<1x2x16x32xf32> to vector<32x32xf32>
    %16 = arith.truncf %15 : vector<32x32xf32> to vector<32x32xbf16>
    %cst_18 = arith.constant dense<0.000000e+00> : vector<32x16xf32>
    %17 = tpu.matmul %16, %0, %cst_18 {dimension_numbers = #tpu.dot_dimension_numbers<[1], [0], [0], [1], [0, 0, 1, 1], [], []>} : vector<32x32xbf16>, vector<32x16xbf16>, vector<32x16xf32> -> vector<32x16xf32>
    %18 = vector.broadcast %1 : vector<1x16xf32> to vector<32x16xf32>
    %19 = arith.addf %17, %18 : vector<32x16xf32>
    %cst_19 = arith.constant 0.000000e+00 : f32
    %20 = vector.broadcast %cst_19 : f32 to vector<32x16xf32>
    %21 = arith.maximumf %19, %20 : vector<32x16xf32>
    %22 = vector.shape_cast %21 : vector<32x16xf32> to vector<2x16x16xf32>
    %23 = vector.extract_strided_slice %22 {offsets = [0, 0, 0], sizes = [1, 16, 16], strides = [1, 1, 1]} : vector<2x16x16xf32> to vector<1x16x16xf32>
    %c0_20 = arith.constant 0 : index
    %c1_21 = arith.constant 1 : index
    %c0_22 = arith.constant 0 : index
    %24 = vector.load %arg10[%c0_20, %c1_21, %c0_22] : memref<18x18x16xf32, #tpu.memory_space<vmem>>, vector<1x16x16xf32>
    tpu.vector_store %arg10[%c0_20, %c1_21, %c0_22], %23 {strides = array<i32>} : memref<18x18x16xf32, #tpu.memory_space<vmem>>, vector<1x16x16xf32>,
    %25 = vector.extract_strided_slice %22 {offsets = [1, 0, 0], sizes = [1, 16, 16], strides = [1, 1, 1]} : vector<2x16x16xf32> to vector<1x16x16xf32>
    %c17 = arith.constant 17 : index
    %c1_23 = arith.constant 1 : index
    %c0_24 = arith.constant 0 : index
    %26 = vector.load %arg10[%c17, %c1_23, %c0_24] : memref<18x18x16xf32, #tpu.memory_space<vmem>>, vector<1x16x16xf32>
    tpu.vector_store %arg10[%c17, %c1_23, %c0_24], %25 {strides = array<i32>} : memref<18x18x16xf32, #tpu.memory_space<vmem>>, vector<1x16x16xf32>,
    %cst_25 = arith.constant 0.000000e+00 : f32
    %27 = vector.broadcast %cst_25 : f32 to vector<18x1x16xf32>
    %c0_26 = arith.constant 0 : index
    %c0_27 = arith.constant 0 : index
    %c0_28 = arith.constant 0 : index
    %28 = vector.load %arg10[%c0_26, %c0_27, %c0_28] : memref<18x18x16xf32, #tpu.memory_space<vmem>>, vector<18x1x16xf32>
    tpu.vector_store %arg10[%c0_26, %c0_27, %c0_28], %27 {strides = array<i32>} : memref<18x18x16xf32, #tpu.memory_space<vmem>>, vector<18x1x16xf32>,
    %c0_29 = arith.constant 0 : index
    %c17_30 = arith.constant 17 : index
    %c0_31 = arith.constant 0 : index
    %29 = vector.load %arg10[%c0_29, %c17_30, %c0_31] : memref<18x18x16xf32, #tpu.memory_space<vmem>>, vector<18x1x16xf32>
    tpu.vector_store %arg10[%c0_29, %c17_30, %c0_31], %27 {strides = array<i32>} : memref<18x18x16xf32, #tpu.memory_space<vmem>>, vector<18x1x16xf32>,
    %cst_32 = arith.constant 0.000000e+00 : f32
    %30 = vector.broadcast %cst_32 : f32 to vector<1x18x16xf32>
    %c0_i32 = arith.constant 0 : i32
    %31 = arith.cmpi eq, %arg1, %c0_i32 : i32
    %32 = arith.extui %31 : i1 to i32
    %c0_i32_33 = arith.constant 0 : i32
    %33 = arith.cmpi ne, %32, %c0_i32_33 : i32
    scf.if %33 {
      %c0_72 = arith.constant 0 : index
      %c0_73 = arith.constant 0 : index
      %c0_74 = arith.constant 0 : index
      %59 = vector.load %arg10[%c0_72, %c0_73, %c0_74] : memref<18x18x16xf32, #tpu.memory_space<vmem>>, vector<1x18x16xf32>
      tpu.vector_store %arg10[%c0_72, %c0_73, %c0_74], %30 {strides = array<i32>} : memref<18x18x16xf32, #tpu.memory_space<vmem>>, vector<1x18x16xf32>,
    } else {
    }
    %c0_i32_34 = arith.constant 0 : i32
    %34 = arith.cmpi eq, %arg1, %c0_i32_34 : i32
    %35 = arith.extui %34 : i1 to i32
    %c0_i32_35 = arith.constant 0 : i32
    %36 = arith.cmpi ne, %35, %c0_i32_35 : i32
    scf.if %36 {
      %c17_72 = arith.constant 17 : index
      %c0_73 = arith.constant 0 : index
      %c0_74 = arith.constant 0 : index
      %59 = vector.load %arg10[%c17_72, %c0_73, %c0_74] : memref<18x18x16xf32, #tpu.memory_space<vmem>>, vector<1x18x16xf32>
      tpu.vector_store %arg10[%c17_72, %c0_73, %c0_74], %30 {strides = array<i32>} : memref<18x18x16xf32, #tpu.memory_space<vmem>>, vector<1x18x16xf32>,
    } else {
    }
    %c0_36 = arith.constant 0 : index
    %c0_37 = arith.constant 0 : index
    %c0_38 = arith.constant 0 : index
    %37 = vector.load %arg10[%c0_36, %c0_37, %c0_38] : memref<18x18x16xf32, #tpu.memory_space<vmem>>, vector<16x16x16xf32>
    %c0_39 = arith.constant 0 : index
    %c1_40 = arith.constant 1 : index
    %c0_41 = arith.constant 0 : index
    %38 = vector.load %arg10[%c0_39, %c1_40, %c0_41] : memref<18x18x16xf32, #tpu.memory_space<vmem>>, vector<16x16x16xf32>
    %c0_42 = arith.constant 0 : index
    %c2 = arith.constant 2 : index
    %c0_43 = arith.constant 0 : index
    %39 = vector.load %arg10[%c0_42, %c2, %c0_43] : memref<18x18x16xf32, #tpu.memory_space<vmem>>, vector<16x16x16xf32>
    %c1_44 = arith.constant 1 : index
    %c0_45 = arith.constant 0 : index
    %c0_46 = arith.constant 0 : index
    %40 = vector.load %arg10[%c1_44, %c0_45, %c0_46] : memref<18x18x16xf32, #tpu.memory_space<vmem>>, vector<16x16x16xf32>
    %c1_47 = arith.constant 1 : index
    %c1_48 = arith.constant 1 : index
    %c0_49 = arith.constant 0 : index
    %41 = vector.load %arg10[%c1_47, %c1_48, %c0_49] : memref<18x18x16xf32, #tpu.memory_space<vmem>>, vector<16x16x16xf32>
    %c1_50 = arith.constant 1 : index
    %c2_51 = arith.constant 2 : index
    %c0_52 = arith.constant 0 : index
    %42 = vector.load %arg10[%c1_50, %c2_51, %c0_52] : memref<18x18x16xf32, #tpu.memory_space<vmem>>, vector<16x16x16xf32>
    %c2_53 = arith.constant 2 : index
    %c0_54 = arith.constant 0 : index
    %c0_55 = arith.constant 0 : index
    %43 = vector.load %arg10[%c2_53, %c0_54, %c0_55] : memref<18x18x16xf32, #tpu.memory_space<vmem>>, vector<16x16x16xf32>
    %c2_56 = arith.constant 2 : index
    %c1_57 = arith.constant 1 : index
    %c0_58 = arith.constant 0 : index
    %44 = vector.load %arg10[%c2_56, %c1_57, %c0_58] : memref<18x18x16xf32, #tpu.memory_space<vmem>>, vector<16x16x16xf32>
    %c2_59 = arith.constant 2 : index
    %c2_60 = arith.constant 2 : index
    %c0_61 = arith.constant 0 : index
    %45 = vector.load %arg10[%c2_59, %c2_60, %c0_61] : memref<18x18x16xf32, #tpu.memory_space<vmem>>, vector<16x16x16xf32>
    %46 = tpu.concatenate %37, %38, %39, %40, %41, %42, %43, %44, %45 in 2 : vector<16x16x16xf32>, vector<16x16x16xf32>, vector<16x16x16xf32>, vector<16x16x16xf32>, vector<16x16x16xf32>, vector<16x16x16xf32>, vector<16x16x16xf32>, vector<16x16x16xf32>, vector<16x16x16xf32> -> vector<16x16x144xf32>
    %47 = vector.shape_cast %46 : vector<16x16x144xf32> to vector<256x144xf32>
    %48 = arith.truncf %47 : vector<256x144xf32> to vector<256x144xbf16>
    %c0_62 = arith.constant 0 : index
    %c0_63 = arith.constant 0 : index
    %49 = vector.load %arg7[%c0_62, %c0_63] : memref<144x128xbf16, #tpu.memory_space<vmem>>, vector<144x128xbf16>
    %cst_64 = arith.constant dense<0.000000e+00> : vector<256x128xf32>
    %50 = tpu.matmul %48, %49, %cst_64 {dimension_numbers = #tpu.dot_dimension_numbers<[1], [0], [0], [1], [0, 0, 1, 1], [], []>} : vector<256x144xbf16>, vector<144x128xbf16>, vector<256x128xf32> -> vector<256x128xf32>
    %c0_65 = arith.constant 0 : index
    %c0_66 = arith.constant 0 : index
    %51 = vector.load %arg8[%c0_65, %c0_66] : memref<1x128xf32, #tpu.memory_space<vmem>>, vector<1x128xf32>
    %52 = vector.broadcast %51 : vector<1x128xf32> to vector<256x128xf32>
    %53 = arith.addf %50, %52 : vector<256x128xf32>
    %cst_67 = arith.constant 0.000000e+00 : f32
    %54 = vector.broadcast %cst_67 : f32 to vector<256x128xf32>
    %55 = arith.maximumf %53, %54 : vector<256x128xf32>
    %56 = vector.shape_cast %55 : vector<256x128xf32> to vector<1x16x16x128xf32>
    %57 = arith.truncf %56 : vector<1x16x16x128xf32> to vector<1x16x16x128xbf16>
    %c0_68 = arith.constant 0 : index
    %c0_69 = arith.constant 0 : index
    %c0_70 = arith.constant 0 : index
    %c0_71 = arith.constant 0 : index
    %58 = vector.load %arg9[%c0_68, %c0_69, %c0_70, %c0_71] : memref<1x16x16x128xbf16, #tpu.memory_space<vmem>>, vector<1x16x16x128xbf16>
    tpu.vector_store %arg9[%c0_68, %c0_69, %c0_70, %c0_71], %57 {strides = array<i32>} : memref<1x16x16x128xbf16, #tpu.memory_space<vmem>>, vector<1x16x16x128xbf16>,
    return
  }
  func.func @transform_0(%arg0: i32, %arg1: i32) -> (i32, i32, i32, i32) {
    %c16_i32 = arith.constant 16 : i32
    %0 = arith.muli %arg1, %c16_i32 : i32
    %c1_i32 = arith.constant 1 : i32
    %1 = arith.subi %0, %c1_i32 : i32
    %c0_i32 = arith.constant 0 : i32
    %2 = arith.maxsi %1, %c0_i32 : i32
    %c0_i32_0 = arith.constant 0 : i32
    %c0_i32_1 = arith.constant 0 : i32
    %c0_i32_2 = arith.constant 0 : i32
    return %arg0, %2, %c0_i32_0, %c0_i32_1 : i32, i32, i32, i32
  }
  func.func @transform_1(%arg0: i32, %arg1: i32) -> (i32, i32, i32, i32) {
    %c0_i32 = arith.constant 0 : i32
    %c0_i32_0 = arith.constant 0 : i32
    %c0_i32_1 = arith.constant 0 : i32
    return %arg0, %arg1, %c0_i32, %c0_i32_0 : i32, i32, i32, i32
  }
  func.func @transform_2(%arg0: i32, %arg1: i32) -> (i32, i32, i32, i32) {
    %c16_i32 = arith.constant 16 : i32
    %0 = arith.muli %arg1, %c16_i32 : i32
    %c16_i32_0 = arith.constant 16 : i32
    %1 = arith.addi %0, %c16_i32_0 : i32
    %c15_i32 = arith.constant 15 : i32
    %2 = arith.minsi %1, %c15_i32 : i32
    %c0_i32 = arith.constant 0 : i32
    %c0_i32_1 = arith.constant 0 : i32
    %c0_i32_2 = arith.constant 0 : i32
    return %arg0, %2, %c0_i32, %c0_i32_1 : i32, i32, i32, i32
  }
  func.func @transform_3(%arg0: i32, %arg1: i32) -> (i32, i32) {
    %c0_i32 = arith.constant 0 : i32
    %c0_i32_0 = arith.constant 0 : i32
    %c0_i32_1 = arith.constant 0 : i32
    return %c0_i32, %c0_i32_0 : i32, i32
  }
  func.func @transform_4(%arg0: i32, %arg1: i32) -> (i32, i32) {
    %c0_i32 = arith.constant 0 : i32
    %c0_i32_0 = arith.constant 0 : i32
    %c0_i32_1 = arith.constant 0 : i32
    return %c0_i32, %c0_i32_0 : i32, i32
  }
  func.func @transform_5(%arg0: i32, %arg1: i32) -> (i32, i32) {
    %c0_i32 = arith.constant 0 : i32
    %c0_i32_0 = arith.constant 0 : i32
    %c0_i32_1 = arith.constant 0 : i32
    return %c0_i32, %c0_i32_0 : i32, i32
  }
  func.func @transform_6(%arg0: i32, %arg1: i32) -> (i32, i32) {
    %c0_i32 = arith.constant 0 : i32
    %c0_i32_0 = arith.constant 0 : i32
    %c0_i32_1 = arith.constant 0 : i32
    return %c0_i32, %c0_i32_0 : i32, i32
  }
  func.func @transform_7(%arg0: i32, %arg1: i32) -> (i32, i32, i32, i32) {
    %c0_i32 = arith.constant 0 : i32
    %c0_i32_0 = arith.constant 0 : i32
    %c0_i32_1 = arith.constant 0 : i32
    return %arg0, %arg1, %c0_i32, %c0_i32_0 : i32, i32, i32, i32
  }
}

</mosaic_0001>

<llo_original>
// kernel: fire_forward.1
$region0: #{fire_forward.1}
  #allocation0 [shape = 'u32[]', space=smem, size = 0x4, offset = 0x4, fixed_abs, tag = 'smem constant byte address 0x4 - core index']
  #allocation1 [shape = 'u32[144,128]{1,0:T(1,128)}', space=vmem, size = 0x12000, scoped, tag = 'internal scratch']
  #allocation2 [shape = 'f32[18,18,16]{2,1,0:T(8,128)}', space=vmem, size = 0x36000, scoped, tag = 'scratch operand']
  %s0 = inlined_call_operand.hbm [shape: f32[2,16,16,32], index: 0, kind: input, shape index: {}, may-alias: {0,1,2}]
  %s1 = inlined_call_operand.hbm [shape: f32[2,16,16,32], index: 1, kind: input, shape index: {}, may-alias: {0,1,2}]
  %s2 = inlined_call_operand.hbm [shape: f32[2,16,16,32], index: 2, kind: input, shape index: {}, may-alias: {0,1,2}]
  %s3 = inlined_call_operand.vmem [shape: bf16[32,16], index: 3, kind: input, shape index: {}]
  %s4 = inlined_call_operand.vmem [shape: f32[1,16], index: 4, kind: input, shape index: {}]
  %s5 = inlined_call_operand.hbm [shape: bf16[144,128], index: 5, kind: input, shape index: {}]
  %s6 = inlined_call_operand.vmem [shape: f32[1,128], index: 6, kind: input, shape index: {}]
  %s7 = inlined_call_operand.hbm [shape: bf16[2,16,16,128], index: 7, kind: output, shape index: {}]
  %s8 = sld [smem:[#allocation0]]
  $region81: #{fire_forward.1} parent=0
    _
  %s10 = ssub.s32 1, %s8
  %s11 = scalar_select 0, %s10, %s8
  $region1: #{fire_forward.1} parent=0
    #allocation3 [shape = 'u8[16384]{0}', space=vmem, size = 0x4000, scoped, tag = 'input window, operand 0']
    #allocation4 [shape = 's32[2]{0}', space=sflag, size = 0x8, scoped, tag = 'scoped memory for fire_forward.1']
    #allocation5 [shape = 's32[2]{0}', space=sflag, size = 0x8, scoped, tag = 'scoped memory for fire_forward.1']
    #allocation6 [shape = 'u8[262144]{0}', space=vmem, size = 0x40000, scoped, tag = 'input window, operand 1']
    #allocation7 [shape = 's32[2]{0}', space=sflag, size = 0x8, scoped, tag = 'scoped memory for fire_forward.1']
    #allocation8 [shape = 'u8[16384]{0}', space=vmem, size = 0x4000, scoped, tag = 'input window, operand 2']
    #allocation9 [shape = 'u8[36864]{0}', space=vmem, size = 0x9000, scoped, tag = 'input window, operand 5, single buffered']
    #allocation10 [shape = 's32[1]{0}', space=sflag, size = 0x4, scoped, tag = 'scoped memory for fire_forward.1']
    #allocation11 [shape = 'u8[131072]{0}', space=vmem, size = 0x20000, scoped, tag = 'output window, operand 0']
    %12 = vsyncpa [#allocation4], 0
    %s13 = scalar_lea.sflag [#allocation4], 1
    %14 = vsyncpa %s13, 0
    %15 = vsyncpa [#allocation7], 0
    %s16 = scalar_lea.sflag [#allocation7], 1
    %17 = vsyncpa %s16, 0
    %18 = vsyncpa [#allocation10], 0
    %19 = vsyncpa [#allocation5], 0
    %s20 = scalar_lea.sflag [#allocation5], 1
    %21 = vsyncpa %s20, 0
    loop: start=0, step=1, limit=4
    $region2: #{fire_forward.1} parent=1 // loop_pre_header
      _
    $region3: #{fire_forward.1} parent=1 // loop_header
      %s23 = sphi 0, %s27
      %p24 = scmp.ge.s32.totalorder %s23, 4
      %s30 = sphi 0, %s42
      %s31 = sphi 0, %s38
      %s32 = sphi 0, %s30
      %s33 = sphi 0, %s31
      %s34 = sphi 0, %s32
      %s35 = sphi 0, %s33
      %s55 = sphi 0, %s57
      %s58 = sphi 0, %s55
      %s59 = sphi 0, %s58
      %s75 = sphi 0, %s59
      %s83 = sphi 0, %s85
      %s86 = sphi 0, %s83
      %s87 = sphi 0, %s86
      %s103 = sphi 0, %s87
      %s119 = sphi 0, %s121
      %s122 = sphi 0, %s119
      %s123 = sphi 0, %s122
      %s139 = sphi 0, %s123
      %s143 = sphi 0, %s143
      %s145 = sphi 0, %s143
      %s146 = sphi 0, %s145
      %s160 = sphi 0, %s146
      %s164 = sphi 0, %s164
      %s166 = sphi 0, %s164
      %s167 = sphi 0, %s166
      %s181 = sphi 0, %s167
      %s185 = sphi 0, %s185
      %s187 = sphi 0, %s185
      %s188 = sphi 0, %s187
      %s202 = sphi 0, %s188
      %s206 = sphi 0, %s206
      %s208 = sphi 0, %s206
      %s209 = sphi 0, %s208
      %s223 = sphi 0, %s209
      %s231 = sphi 0, %s233
      %s234 = sphi 0, %s231
      %s235 = sphi 0, %s234
      %s251 = sphi 0, %s235
    $region4: #{fire_forward.1} parent=1 // loop_header_branch
      %26 = sbr.rel (%p24) target = $region8
    $region5: #{fire_forward.1} parent=1 // loop_body
      %s28 = ssub.s32 %s23, 1
      %s29 = ssub.s32 %s23, 2
      %s36 = sadd.s32 1, %s31
      %p37 = scmp.ge.s32.totalorder %s36, 1
      %s38 = scalar_select %p37, 0, %s36
      %s39 = sadd.s32 1, %s30
      %s40 = scalar_select %p37, %s39, %s30
      %p41 = scmp.ge.s32.totalorder %s40, 2
      %s42 = scalar_select %p41, 0, %s40
      %s43 = smul.u32 %s31, 16
      %s44 = ssub.s32 %s43, 1
      %p45 = scmp.gt.s32.totalorder %s44, 0
      %s46 = scalar_select %p45, %s44, 0
      %s47 = smul.u32 %s38, 16
      %s48 = ssub.s32 %s47, 1
      %p49 = scmp.gt.s32.totalorder %s48, 0
      %s50 = scalar_select %p49, %s48, 0
      %s51 = ssub.s32 %s30, %s42
      %s52 = ssub.s32 %s46, %s50
      %s53 = sor.u32 %s51, %s52
      %p54 = scmp.eq.s32.totalorder %s53, 0
      %s56 = sadd.s32 %s55, 1
      %s57 = scalar_select %p54, %s55, %s56
      %p60 = pneg %p54
      %p61 = scmp.eq.s32.totalorder %s23, 1
      %p62 = por %p60, %p61
      %p63 = scmp.ne.s32.totalorder %s55, %s58
      %p64 = scmp.eq.s32.totalorder %s23, 0
      %p65 = por %p63, %p64
      %p66 = scmp.ne.s32.totalorder %s55, %s58
      %p67 = scmp.eq.s32.totalorder %s28, 1
      %p68 = por %p66, %p67
      %p69 = scmp.ne.s32.totalorder %s58, %s59
      %p70 = scmp.eq.s32.totalorder %s28, 0
      %p71 = por %p69, %p70
      %p72 = scmp.ne.s32.totalorder %s58, %s59
      %p73 = scmp.eq.s32.totalorder %s29, 1
      %p74 = por %p72, %p73
      %p76 = scmp.ne.s32.totalorder %s59, %s75
      %p77 = scmp.eq.s32.totalorder %s29, 0
      %p78 = por %p76, %p77
      %s79 = ssub.s32 %s30, %s42
      %s80 = ssub.s32 %s31, %s38
      %s81 = sor.u32 %s79, %s80
      %p82 = scmp.eq.s32.totalorder %s81, 0
      %s84 = sadd.s32 %s83, 1
      %s85 = scalar_select %p82, %s83, %s84
      %p88 = pneg %p82
      %p89 = scmp.eq.s32.totalorder %s23, 1
      %p90 = por %p88, %p89
      %p91 = scmp.ne.s32.totalorder %s83, %s86
      %p92 = scmp.eq.s32.totalorder %s23, 0
      %p93 = por %p91, %p92
      %p94 = scmp.ne.s32.totalorder %s83, %s86
      %p95 = scmp.eq.s32.totalorder %s28, 1
      %p96 = por %p94, %p95
      %p97 = scmp.ne.s32.totalorder %s86, %s87
      %p98 = scmp.eq.s32.totalorder %s28, 0
      %p99 = por %p97, %p98
      %p100 = scmp.ne.s32.totalorder %s86, %s87
      %p101 = scmp.eq.s32.totalorder %s29, 1
      %p102 = por %p100, %p101
      %p104 = scmp.ne.s32.totalorder %s87, %s103
      %p105 = scmp.eq.s32.totalorder %s29, 0
      %p106 = por %p104, %p105
      %s107 = smul.u32 %s31, 16
      %s108 = sadd.s32 %s107, 16
      %p109 = scmp.lt.s32.totalorder %s108, 15
      %s110 = scalar_select %p109, %s108, 15
      %s111 = smul.u32 %s38, 16
      %s112 = sadd.s32 %s111, 16
      %p113 = scmp.lt.s32.totalorder %s112, 15
      %s114 = scalar_select %p113, %s112, 15
      %s115 = ssub.s32 %s30, %s42
      %s116 = ssub.s32 %s110, %s114
      %s117 = sor.u32 %s115, %s116
      %p118 = scmp.eq.s32.totalorder %s117, 0
      %s120 = sadd.s32 %s119, 1
      %s121 = scalar_select %p118, %s119, %s120
      %p124 = pneg %p118
      %p125 = scmp.eq.s32.totalorder %s23, 1
      %p126 = por %p124, %p125
      %p127 = scmp.ne.s32.totalorder %s119, %s122
      %p128 = scmp.eq.s32.totalorder %s23, 0
      %p129 = por %p127, %p128
      %p130 = scmp.ne.s32.totalorder %s119, %s122
      %p131 = scmp.eq.s32.totalorder %s28, 1
      %p132 = por %p130, %p131
      %p133 = scmp.ne.s32.totalorder %s122, %s123
      %p134 = scmp.eq.s32.totalorder %s28, 0
      %p135 = por %p133, %p134
      %p136 = scmp.ne.s32.totalorder %s122, %s123
      %p137 = scmp.eq.s32.totalorder %s29, 1
      %p138 = por %p136, %p137
      %p140 = scmp.ne.s32.totalorder %s123, %s139
      %p141 = scmp.eq.s32.totalorder %s29, 0
      %p142 = por %p140, %p141
      %s144 = sadd.s32 %s143, 1
      %p147 = scmp.eq.s32.totalorder %s23, 1
      %p148 = scmp.ne.s32.totalorder %s143, %s145
      %p149 = scmp.eq.s32.totalorder %s23, 0
      %p150 = por %p148, %p149
      %p151 = scmp.ne.s32.totalorder %s143, %s145
      %p152 = scmp.eq.s32.totalorder %s28, 1
      %p153 = por %p151, %p152
      %p154 = scmp.ne.s32.totalorder %s145, %s146
      %p155 = scmp.eq.s32.totalorder %s28, 0
      %p156 = por %p154, %p155
      %p157 = scmp.ne.s32.totalorder %s145, %s146
      %p158 = scmp.eq.s32.totalorder %s29, 1
      %p159 = por %p157, %p158
      %p161 = scmp.ne.s32.totalorder %s146, %s160
      %p162 = scmp.eq.s32.totalorder %s29, 0
      %p163 = por %p161, %p162
      %s165 = sadd.s32 %s164, 1
      %p168 = scmp.eq.s32.totalorder %s23, 1
      %p169 = scmp.ne.s32.totalorder %s164, %s166
      %p170 = scmp.eq.s32.totalorder %s23, 0
      %p171 = por %p169, %p170
      %p172 = scmp.ne.s32.totalorder %s164, %s166
      %p173 = scmp.eq.s32.totalorder %s28, 1
      %p174 = por %p172, %p173
      %p175 = scmp.ne.s32.totalorder %s166, %s167
      %p176 = scmp.eq.s32.totalorder %s28, 0
      %p177 = por %p175, %p176
      %p178 = scmp.ne.s32.totalorder %s166, %s167
      %p179 = scmp.eq.s32.totalorder %s29, 1
      %p180 = por %p178, %p179
      %p182 = scmp.ne.s32.totalorder %s167, %s181
      %p183 = scmp.eq.s32.totalorder %s29, 0
      %p184 = por %p182, %p183
      %s186 = sadd.s32 %s185, 1
      %p189 = scmp.eq.s32.totalorder %s23, 1
      %p190 = scmp.ne.s32.totalorder %s185, %s187
      %p191 = scmp.eq.s32.totalorder %s23, 0
      %p192 = por %p190, %p191
      %p193 = scmp.ne.s32.totalorder %s185, %s187
      %p194 = scmp.eq.s32.totalorder %s28, 1
      %p195 = por %p193, %p194
      %p196 = scmp.ne.s32.totalorder %s187, %s188
      %p197 = scmp.eq.s32.totalorder %s28, 0
      %p198 = por %p196, %p197
      %p199 = scmp.ne.s32.totalorder %s187, %s188
      %p200 = scmp.eq.s32.totalorder %s29, 1
      %p201 = por %p199, %p200
      %p203 = scmp.ne.s32.totalorder %s188, %s202
      %p204 = scmp.eq.s32.totalorder %s29, 0
      %p205 = por %p203, %p204
      %s207 = sadd.s32 %s206, 1
      %p210 = scmp.eq.s32.totalorder %s23, 1
      %p211 = scmp.ne.s32.totalorder %s206, %s208
      %p212 = scmp.eq.s32.totalorder %s23, 0
      %p213 = por %p211, %p212
      %p214 = scmp.ne.s32.totalorder %s206, %s208
      %p215 = scmp.eq.s32.totalorder %s28, 1
      %p216 = por %p214, %p215
      %p217 = scmp.ne.s32.totalorder %s208, %s209
      %p218 = scmp.eq.s32.totalorder %s28, 0
      %p219 = por %p217, %p218
      %p220 = scmp.ne.s32.totalorder %s208, %s209
      %p221 = scmp.eq.s32.totalorder %s29, 1
      %p222 = por %p220, %p221
      %p224 = scmp.ne.s32.totalorder %s209, %s223
      %p225 = scmp.eq.s32.totalorder %s29, 0
      %p226 = por %p224, %p225
      %s227 = ssub.s32 %s30, %s42
      %s228 = ssub.s32 %s31, %s38
      %s229 = sor.u32 %s227, %s228
      %p230 = scmp.eq.s32.totalorder %s229, 0
      %s232 = sadd.s32 %s231, 1
      %s233 = scalar_select %p230, %s231, %s232
      %p236 = pneg %p230
      %p237 = scmp.eq.s32.totalorder %s23, 1
      %p238 = por %p236, %p237
      %p239 = scmp.ne.s32.totalorder %s231, %s234
      %p240 = scmp.eq.s32.totalorder %s23, 0
      %p241 = por %p239, %p240
      %p242 = scmp.ne.s32.totalorder %s231, %s234
      %p243 = scmp.eq.s32.totalorder %s28, 1
      %p244 = por %p242, %p243
      %p245 = scmp.ne.s32.totalorder %s234, %s235
      %p246 = scmp.eq.s32.totalorder %s28, 0
      %p247 = por %p245, %p246
      %p248 = scmp.ne.s32.totalorder %s234, %s235
      %p249 = scmp.eq.s32.totalorder %s29, 1
      %p250 = por %p248, %p249
      %p252 = scmp.ne.s32.totalorder %s235, %s251
      %p253 = scmp.eq.s32.totalorder %s29, 0
      %p254 = por %p252, %p253
      %p255 = scmp.le.s32.totalorder 1, %s23
      %p256 = scmp.lt.s32.totalorder %s23, 3
      %p257 = pnand %p255, %p256
      %p258 = pneg %p257
      // Predicated region
      $region9: #{fire_forward.1} parent=5 // pred_check
        _
      $region10: #{fire_forward.1} parent=5 // pred_check_branch
        %260 = sbr.rel (%p257) target = $region12
      $region11: #{fire_forward.1} parent=5 // pred_region
        %s261 = ssub.s32 %s23, 1
        // Predicated region
        $region13: #{fire_forward.1} parent=11 // pred_check
          %p262 = pneg %p156
        $region14: #{fire_forward.1} parent=11 // pred_check_branch
          %264 = sbr.rel (%p262) target = $region16
        $region15: #{fire_forward.1} parent=11 // pred_region
          _
        $region16: #{fire_forward.1} parent=11 // pred_fallthru
          _
        // Predicated region
        $region17: #{fire_forward.1} parent=11 // pred_check
          %p265 = pneg %p177
        $region18: #{fire_forward.1} parent=11 // pred_check_branch
          %267 = sbr.rel (%p265) target = $region20
        $region19: #{fire_forward.1} parent=11 // pred_region
          _
        $region20: #{fire_forward.1} parent=11 // pred_fallthru
          _
        // Predicated region
        $region21: #{fire_forward.1} parent=11 // pred_check
          %p268 = pneg %p198
        $region22: #{fire_forward.1} parent=11 // pred_check_branch
          %270 = sbr.rel (%p268) target = $region24
        $region23: #{fire_forward.1} parent=11 // pred_region
          %s272 = ssub.s32 1152, 1152
          %273 = vsyncadd [#allocation10], %s272
          %s274 = sshll.u32 [#allocation9], 4
          %s275 = int_to_ptr.vmem [resolvable:$true] %s274
          %280 = dma.hbm_to_vmem [thread:$0]  %s5, 1152, %s275, [#allocation10], 64, 64, 4
        $region24: #{fire_forward.1} parent=11 // pred_fallthru
          _
        // Predicated region
        $region25: #{fire_forward.1} parent=11 // pred_check
          %p281 = pneg %p219
        $region26: #{fire_forward.1} parent=11 // pred_check_branch
          %283 = sbr.rel (%p281) target = $region28
        $region27: #{fire_forward.1} parent=11 // pred_region
          _
        $region28: #{fire_forward.1} parent=11 // pred_fallthru
          _
      $region12: #{fire_forward.1} parent=5 // pred_fallthru
        _
      %p284 = scmp.lt.s32.totalorder %s23, 2
      // Predicated region
      $region29: #{fire_forward.1} parent=5 // pred_check
        %p285 = pneg %p284
      $region30: #{fire_forward.1} parent=5 // pred_check_branch
        %287 = sbr.rel (%p285) target = $region32
      $region31: #{fire_forward.1} parent=5 // pred_region
        // Predicated region
        $region33: #{fire_forward.1} parent=31 // pred_check
          %p288 = pneg %p65
        $region34: #{fire_forward.1} parent=31 // pred_check_branch
          %290 = sbr.rel (%p288) target = $region36
        $region35: #{fire_forward.1} parent=31 // pred_region
          %s291 = sand.u32 %s55, 1
          %s292 = scalar_lea.sflag [#allocation4], %s291
          %s293 = sand.u32 %s55, 1
          %s294 = smul.addr %s293, 16
          %s295 = scalar_lea.vmem [#allocation3], %s294
          %s296 = smul.u32 %s31, 16
          %s297 = ssub.s32 %s296, 1
          %p298 = scmp.gt.s32.totalorder %s297, 0
          %s299 = scalar_select %p298, %s297, 0
          %s301 = ssub.s32 256, 256
          %302 = vsyncadd %s292, %s301
          %s303 = smul.addr %s299, 2
          %s304 = smul.addr %s30, 32
          %s305 = sadd.s32 %s303, %s304
          %s306 = smul.addr %s305, 128
          %s307 = scalar_lea.hbm %s0, %s306
          %s308 = sshll.u32 %s295, 4
          %s309 = int_to_ptr.vmem [resolvable:$true] %s308
          %314 = dma.hbm_to_vmem [thread:$0]  %s307, 256, %s309, %s292, 128, 128, 8
        $region36: #{fire_forward.1} parent=31 // pred_fallthru
          _
        // Predicated region
        $region37: #{fire_forward.1} parent=31 // pred_check
          %p315 = pneg %p93
        $region38: #{fire_forward.1} parent=31 // pred_check_branch
          %317 = sbr.rel (%p315) target = $region40
        $region39: #{fire_forward.1} parent=31 // pred_region
          %s318 = sand.u32 %s23, 1
          %s319 = scalar_lea.sflag [#allocation7], %s318
          %s320 = sand.u32 %s83, 1
          %s321 = smul.addr %s320, 256
          %s322 = scalar_lea.vmem [#allocation6], %s321
          %s323 = smul.u32 16, %s31
          %s325 = ssub.s32 4096, 4096
          %326 = vsyncadd %s319, %s325
          %s327 = smul.addr %s323, 2
          %s328 = smul.addr %s30, 32
          %s329 = sadd.s32 %s327, %s328
          %s330 = smul.addr %s329, 128
          %s331 = scalar_lea.hbm %s1, %s330
          %s332 = sshll.u32 %s322, 4
          %s333 = int_to_ptr.vmem [resolvable:$true] %s332
          %338 = dma.hbm_to_vmem [thread:$0]  %s331, 4096, %s333, %s319, 128, 128, 8
        $region40: #{fire_forward.1} parent=31 // pred_fallthru
          _
        // Predicated region
        $region41: #{fire_forward.1} parent=31 // pred_check
          %p339 = pneg %p129
        $region42: #{fire_forward.1} parent=31 // pred_check_branch
          %341 = sbr.rel (%p339) target = $region44
        $region43: #{fire_forward.1} parent=31 // pred_region
          %s342 = sand.u32 %s23, 1
          %s343 = scalar_lea.sflag [#allocation7], %s342
          %s344 = sand.u32 %s119, 1
          %s345 = smul.addr %s344, 16
          %s346 = scalar_lea.vmem [#allocation8], %s345
          %s347 = smul.u32 %s31, 16
          %s348 = sadd.s32 %s347, 16
          %p349 = scmp.lt.s32.totalorder %s348, 15
          %s350 = scalar_select %p349, %s348, 15
          %s352 = ssub.s32 256, 256
          %353 = vsyncadd %s343, %s352
          %s354 = smul.addr %s350, 2
          %s355 = smul.addr %s30, 32
          %s356 = sadd.s32 %s354, %s355
          %s357 = smul.addr %s356, 128
          %s358 = scalar_lea.hbm %s2, %s357
          %s359 = sshll.u32 %s346, 4
          %s360 = int_to_ptr.vmem [resolvable:$true] %s359
          %365 = dma.hbm_to_vmem [thread:$0]  %s358, 256, %s360, %s343, 128, 128, 8
        $region44: #{fire_forward.1} parent=31 // pred_fallthru
          _
      $region32: #{fire_forward.1} parent=5 // pred_fallthru
        _
      %p366 = scmp.le.s32.totalorder 1, %s23
      %p367 = scmp.lt.s32.totalorder %s23, 3
      %p368 = pnand %p366, %p367
      %p369 = pneg %p368
      // Predicated region
      $region45: #{fire_forward.1} parent=5 // pred_check
        _
      $region46: #{fire_forward.1} parent=5 // pred_check_branch
        %371 = sbr.rel (%p368) target = $region48
      $region47: #{fire_forward.1} parent=5 // pred_region
        %s372 = ssub.s32 %s23, 1
        %s373 = sand.u32 %s58, 1
        %s374 = scalar_lea.sflag [#allocation4], %s373
        %s375 = sand.u32 %s58, 1
        %s376 = smul.addr %s375, 16
        %s377 = scalar_lea.vmem [#allocation3], %s376
        // Predicated region
        $region49: #{fire_forward.1} parent=47 // pred_check
          %p378 = pneg %p71
        $region50: #{fire_forward.1} parent=47 // pred_check_branch
          %380 = sbr.rel (%p378) target = $region52
        $region51: #{fire_forward.1} parent=47 // pred_region
          %381 = dma.done %s374, 256
        $region52: #{fire_forward.1} parent=47 // pred_fallthru
          _
        %s382 = sand.u32 %s28, 1
        %s383 = scalar_lea.sflag [#allocation7], %s382
        %s384 = sand.u32 %s86, 1
        %s385 = smul.addr %s384, 256
        %s386 = scalar_lea.vmem [#allocation6], %s385
        // Predicated region
        $region53: #{fire_forward.1} parent=47 // pred_check
          %p387 = pneg %p99
        $region54: #{fire_forward.1} parent=47 // pred_check_branch
          %389 = sbr.rel (%p387) target = $region56
        $region55: #{fire_forward.1} parent=47 // pred_region
          %390 = dma.done %s383, 4096
        $region56: #{fire_forward.1} parent=47 // pred_fallthru
          _
        %s391 = sand.u32 %s28, 1
        %s392 = scalar_lea.sflag [#allocation7], %s391
        %s393 = sand.u32 %s122, 1
        %s394 = smul.addr %s393, 16
        %s395 = scalar_lea.vmem [#allocation8], %s394
        // Predicated region
        $region57: #{fire_forward.1} parent=47 // pred_check
          %p396 = pneg %p135
        $region58: #{fire_forward.1} parent=47 // pred_check_branch
          %398 = sbr.rel (%p396) target = $region60
        $region59: #{fire_forward.1} parent=47 // pred_region
          %399 = dma.done %s392, 256
        $region60: #{fire_forward.1} parent=47 // pred_fallthru
          _
        // Predicated region
        $region61: #{fire_forward.1} parent=47 // pred_check
          %p400 = pneg %p198
        $region62: #{fire_forward.1} parent=47 // pred_check_branch
          %402 = sbr.rel (%p400) target = $region64
        $region63: #{fire_forward.1} parent=47 // pred_region
          %403 = dma.done [#allocation10], 1152
        $region64: #{fire_forward.1} parent=47 // pred_fallthru
          _
        %s404 = sand.u32 %s58, 1
        %s405 = scalar_lea.sflag [#allocation4], %s404
        %s406 = sand.u32 %s58, 1
        %s407 = smul.addr %s406, 16
        %s408 = scalar_lea.vmem [#allocation3], %s407
        %p409 = pneg %p71
        %p410 = pneg %p68
        %s411 = sand.u32 %s28, 1
        %s412 = scalar_lea.sflag [#allocation7], %s411
        %s413 = sand.u32 %s86, 1
        %s414 = smul.addr %s413, 256
        %s415 = scalar_lea.vmem [#allocation6], %s414
        %p416 = pneg %p99
        %p417 = pneg %p96
        %s418 = sand.u32 %s28, 1
        %s419 = scalar_lea.sflag [#allocation7], %s418
        %s420 = sand.u32 %s122, 1
        %s421 = smul.addr %s420, 16
        %s422 = scalar_lea.vmem [#allocation8], %s421
        %p423 = pneg %p135
        %p424 = pneg %p132
        %p425 = pneg %p156
        %p426 = pneg %p153
        %p427 = pneg %p177
        %p428 = pneg %p174
        %p429 = pneg %p198
        %p430 = pneg %p195
        %p431 = pneg %p219
        %p432 = pneg %p216
        %p433 = pneg %p247
        %p434 = pneg %p244
        %s435 = sand.u32 %s234, 1
        %s436 = scalar_lea.sflag [#allocation5], %s435
        %s437 = sand.u32 %s234, 1
        %s438 = smul.addr %s437, 128
        %s439 = scalar_lea.vmem [#allocation11], %s438
        %s440 = smul.u32 %s33, 16
        %s441 = ssub.s32 %s440, 1
        %p442 = scmp.gt.s32.totalorder %s441, 0
        %s443 = scalar_select %p442, %s441, 0
        %s444 = smul.u32 16, %s33
        %s445 = smul.u32 %s33, 16
        %s446 = sadd.s32 %s445, 16
        %p447 = scmp.lt.s32.totalorder %s446, 15
        %s448 = scalar_select %p447, %s446, 15
        %s449 = smul.u32 16, %s33
        %v451 = vld [vmem:[%s3] sm:$0xf]
        %v452 = vld [vmem:[%s3 + $0x4] sm:$0xf]
        %v453 = vld [vmem:[%s3 + $0x8] sm:$0xf]
        %v454 = vld [vmem:[%s3 + $0xc] sm:$0xf]
        %v455 = vld [vmem:[%s4] sm:$0x1]
        %v456 = vld [vmem:[%s386] sm:$0xff]
        %v457 = vld [vmem:[%s386 + $0x8] sm:$0xff]
        %v458 = vld [vmem:[%s386 + $0x10] sm:$0xff]
        %v459 = vld [vmem:[%s386 + $0x18] sm:$0xff]
        %v460 = vld [vmem:[%s386 + $0x20] sm:$0xff]
        %v461 = vld [vmem:[%s386 + $0x28] sm:$0xff]
        %v462 = vld [vmem:[%s386 + $0x30] sm:$0xff]
        %v463 = vld [vmem:[%s386 + $0x38] sm:$0xff]
        %v464 = vld [vmem:[%s386 + $0x40] sm:$0xff]
        %v465 = vld [vmem:[%s386 + $0x48] sm:$0xff]
        %v466 = vld [vmem:[%s386 + $0x50] sm:$0xff]
        %v467 = vld [vmem:[%s386 + $0x58] sm:$0xff]
        %v468 = vld [vmem:[%s386 + $0x60] sm:$0xff]
        %v469 = vld [vmem:[%s386 + $0x68] sm:$0xff]
        %v470 = vld [vmem:[%s386 + $0x70] sm:$0xff]
        %v471 = vld [vmem:[%s386 + $0x78] sm:$0xff]
        %v472 = vld [vmem:[%s386 + $0x80] sm:$0xff]
        %v473 = vld [vmem:[%s386 + $0x88] sm:$0xff]
        %v474 = vld [vmem:[%s386 + $0x90] sm:$0xff]
        %v475 = vld [vmem:[%s386 + $0x98] sm:$0xff]
        %v476 = vld [vmem:[%s386 + $0xa0] sm:$0xff]
        %v477 = vld [vmem:[%s386 + $0xa8] sm:$0xff]
        %v478 = vld [vmem:[%s386 + $0xb0] sm:$0xff]
        %v479 = vld [vmem:[%s386 + $0xb8] sm:$0xff]
        %v480 = vld [vmem:[%s386 + $0xc0] sm:$0xff]
        %v481 = vld [vmem:[%s386 + $0xc8] sm:$0xff]
        %v482 = vld [vmem:[%s386 + $0xd0] sm:$0xff]
        %v483 = vld [vmem:[%s386 + $0xd8] sm:$0xff]
        %v484 = vld [vmem:[%s386 + $0xe0] sm:$0xff]
        %v485 = vld [vmem:[%s386 + $0xe8] sm:$0xff]
        %v486 = vld [vmem:[%s386 + $0xf0] sm:$0xff]
        %v487 = vld [vmem:[%s386 + $0xf8] sm:$0xff]
        %v488 = vpack.c.bf16 %v457, %v456
        %v489 = vpack.c.bf16 %v459, %v458
        %v490 = vpack.c.bf16 %v461, %v460
        %v491 = vpack.c.bf16 %v463, %v462
        %v492 = vpack.c.bf16 %v465, %v464
        %v493 = vpack.c.bf16 %v467, %v466
        %v494 = vpack.c.bf16 %v469, %v468
        %v495 = vpack.c.bf16 %v471, %v470
        %v496 = vpack.c.bf16 %v473, %v472
        %v497 = vpack.c.bf16 %v475, %v474
        %v498 = vpack.c.bf16 %v477, %v476
        %v499 = vpack.c.bf16 %v479, %v478
        %v500 = vpack.c.bf16 %v481, %v480
        %v501 = vpack.c.bf16 %v483, %v482
        %v502 = vpack.c.bf16 %v485, %v484
        %v503 = vpack.c.bf16 %v487, %v486
        %v505 = vlaneseq
        %v506 = vshrl.u32 %v505, 7
        %v507 = vsub.s32 0, %v506
        %v508 = vrot.slane %v455, %v507
        %v514 = vunpack.c.l.b16 %v451
        %v515 = vunpack.c.l.b16 %v452
        %v516 = vunpack.c.l.b16 %v453
        %v517 = vunpack.c.l.b16 %v454
        %v518 = vpack.c.b16 %v515, %v514
        %v519 = vpack.c.b16 %v517, %v516
        %vm522 = vcmask 261120
        %v524 = vsel %vm522, %v488, 0
        %v527 = vsel %vm522, %v489, 0
        %v530 = vsel %vm522, %v490, 0
        %v533 = vsel %vm522, %v491, 0
        %v536 = vsel %vm522, %v492, 0
        %v539 = vsel %vm522, %v493, 0
        %v542 = vsel %vm522, %v494, 0
        %v545 = vsel %vm522, %v495, 0
        %v548 = vsel %vm522, %v496, 0
        %v551 = vsel %vm522, %v497, 0
        %v554 = vsel %vm522, %v498, 0
        %v557 = vsel %vm522, %v499, 0
        %v560 = vsel %vm522, %v500, 0
        %v563 = vsel %vm522, %v501, 0
        %v566 = vsel %vm522, %v502, 0
        %v569 = vsel %vm522, %v503, 0
        %571 = vmatprep.subr.bf16.mxu0 0
        %572 = vmatpush1.bf16.msra.mxu0 %v518
        %573 = vmatprep.subr.bf16.mxu0 0
        %574 = vmatpush1.bf16.msra.mxu0 %v519
        %575 = vmatprep.subr.bf16.mxu0 0
        %576 = vmatpush1.bf16.msra.mxu0 0
        %577 = vmatprep.subr.bf16.mxu0 0
        %578 = vmatpush1.bf16.msra.mxu0 0
        %579 = vmatprep.subr.bf16.mxu0 0
        %580 = vmatpush1.bf16.msra.mxu0 0
        %581 = vmatprep.subr.bf16.mxu0 0
        %582 = vmatpush1.bf16.msra.mxu0 0
        %583 = vmatprep.subr.bf16.mxu0 0
        %584 = vmatpush1.bf16.msra.mxu0 0
        %585 = vmatprep.subr.bf16.mxu0 0
        %586 = vmatpush1.bf16.msra.mxu0 0
        %587 = vmatprep.subr.bf16.mxu0 0
        %588 = vmatpush1.bf16.msra.mxu0 0
        %589 = vmatprep.subr.bf16.mxu0 0
        %590 = vmatpush1.bf16.msra.mxu0 0
        %591 = vmatprep.subr.bf16.mxu0 0
        %592 = vmatpush1.bf16.msra.mxu0 0
        %593 = vmatprep.subr.bf16.mxu0 0
        %594 = vmatpush1.bf16.msra.mxu0 0
        %595 = vmatprep.subr.bf16.mxu0 0
        %596 = vmatpush1.bf16.msra.mxu0 0
        %597 = vmatprep.subr.bf16.mxu0 0
        %598 = vmatpush1.bf16.msra.mxu0 0
        %599 = vmatprep.subr.bf16.mxu0 0
        %600 = vmatpush1.bf16.msra.mxu0 0
        %601 = vmatprep.subr.bf16.mxu0 0
        %602 = vmatpush1.bf16.msra.mxu0 0
        %603 = vmatprep.mubr.bf16.mxu0 0
        %604 = vmatmul.mubr.bf16.gmra.mrb[0].mxu0 %v524
        %v605 = vpop.f32.mrb[0].mxu0
        %v606 = vadd.f32 %v508, %v605
        %v607 = vpop.f32.mrb[0].mxu0
        %v608 = vpop.f32.mrb[0].mxu0
        %v609 = vadd.f32 %v508, %v608
        %v610 = vpop.f32.mrb[0].mxu0
        %611 = vmatprep.mubr.bf16.mxu0 0
        %612 = vmatmul.mubr.bf16.gmra.mrb[0].mxu0 %v527
        %v613 = vpop.f32.mrb[0].mxu0
        %v614 = vadd.f32 %v508, %v613
        %v615 = vpop.f32.mrb[0].mxu0
        %v616 = vpop.f32.mrb[0].mxu0
        %v617 = vadd.f32 %v508, %v616
        %v618 = vpop.f32.mrb[0].mxu0
        %619 = vmatprep.mubr.bf16.mxu0 0
        %620 = vmatmul.mubr.bf16.gmra.mrb[0].mxu0 %v530
        %v621 = vpop.f32.mrb[0].mxu0
        %v622 = vadd.f32 %v508, %v621
        %v623 = vpop.f32.mrb[0].mxu0
        %v624 = vpop.f32.mrb[0].mxu0
        %v625 = vadd.f32 %v508, %v624
        %v626 = vpop.f32.mrb[0].mxu0
        %627 = vmatprep.mubr.bf16.mxu0 0
        %628 = vmatmul.mubr.bf16.gmra.mrb[0].mxu0 %v533
        %v629 = vpop.f32.mrb[0].mxu0
        %v630 = vadd.f32 %v508, %v629
        %v631 = vpop.f32.mrb[0].mxu0
        %v632 = vpop.f32.mrb[0].mxu0
        %v633 = vadd.f32 %v508, %v632
        %v634 = vpop.f32.mrb[0].mxu0
        %635 = vmatprep.mubr.bf16.mxu0 0
        %636 = vmatmul.mubr.bf16.gmra.mrb[0].mxu0 %v536
        %v637 = vpop.f32.mrb[0].mxu0
        %v638 = vadd.f32 %v508, %v637
        %v639 = vpop.f32.mrb[0].mxu0
        %v640 = vpop.f32.mrb[0].mxu0
        %v641 = vadd.f32 %v508, %v640
        %v642 = vpop.f32.mrb[0].mxu0
        %643 = vmatprep.mubr.bf16.mxu0 0
        %644 = vmatmul.mubr.bf16.gmra.mrb[0].mxu0 %v539
        %v645 = vpop.f32.mrb[0].mxu0
        %v646 = vadd.f32 %v508, %v645
        %v647 = vpop.f32.mrb[0].mxu0
        %v648 = vpop.f32.mrb[0].mxu0
        %v649 = vadd.f32 %v508, %v648
        %v650 = vpop.f32.mrb[0].mxu0
        %651 = vmatprep.mubr.bf16.mxu0 0
        %652 = vmatmul.mubr.bf16.gmra.mrb[0].mxu0 %v542
        %v653 = vpop.f32.mrb[0].mxu0
        %v654 = vadd.f32 %v508, %v653
        %v655 = vpop.f32.mrb[0].mxu0
        %v656 = vpop.f32.mrb[0].mxu0
        %v657 = vadd.f32 %v508, %v656
        %v658 = vpop.f32.mrb[0].mxu0
        %659 = vmatprep.mubr.bf16.mxu0 0
        %660 = vmatmul.mubr.bf16.gmra.mrb[0].mxu0 %v545
        %v661 = vpop.f32.mrb[0].mxu0
        %v662 = vadd.f32 %v508, %v661
        %v663 = vpop.f32.mrb[0].mxu0
        %v664 = vpop.f32.mrb[0].mxu0
        %v665 = vadd.f32 %v508, %v664
        %v666 = vpop.f32.mrb[0].mxu0
        %667 = vmatprep.mubr.bf16.mxu0 0
        %668 = vmatmul.mubr.bf16.gmra.mrb[0].mxu0 %v548
        %v669 = vpop.f32.mrb[0].mxu0
        %v670 = vadd.f32 %v508, %v669
        %v671 = vpop.f32.mrb[0].mxu0
        %v672 = vpop.f32.mrb[0].mxu0
        %v673 = vadd.f32 %v508, %v672
        %v674 = vpop.f32.mrb[0].mxu0
        %675 = vmatprep.mubr.bf16.mxu0 0
        %676 = vmatmul.mubr.bf16.gmra.mrb[0].mxu0 %v551
        %v677 = vpop.f32.mrb[0].mxu0
        %v678 = vadd.f32 %v508, %v677
        %v679 = vpop.f32.mrb[0].mxu0
        %v680 = vpop.f32.mrb[0].mxu0
        %v681 = vadd.f32 %v508, %v680
        %v682 = vpop.f32.mrb[0].mxu0
        %683 = vmatprep.mubr.bf16.mxu0 0
        %684 = vmatmul.mubr.bf16.gmra.mrb[0].mxu0 %v554
        %v685 = vpop.f32.mrb[0].mxu0
        %v686 = vadd.f32 %v508, %v685
        %v687 = vpop.f32.mrb[0].mxu0
        %v688 = vpop.f32.mrb[0].mxu0
        %v689 = vadd.f32 %v508, %v688
        %v690 = vpop.f32.mrb[0].mxu0
        %691 = vmatprep.mubr.bf16.mxu0 0
        %692 = vmatmul.mubr.bf16.gmra.mrb[0].mxu0 %v557
        %v693 = vpop.f32.mrb[0].mxu0
        %v694 = vadd.f32 %v508, %v693
        %v695 = vpop.f32.mrb[0].mxu0
        %v696 = vpop.f32.mrb[0].mxu0
        %v697 = vadd.f32 %v508, %v696
        %v698 = vpop.f32.mrb[0].mxu0
        %699 = vmatprep.mubr.bf16.mxu0 0
        %700 = vmatmul.mubr.bf16.gmra.mrb[0].mxu0 %v560
        %v701 = vpop.f32.mrb[0].mxu0
        %v702 = vadd.f32 %v508, %v701
        %v703 = vpop.f32.mrb[0].mxu0
        %v704 = vpop.f32.mrb[0].mxu0
        %v705 = vadd.f32 %v508, %v704
        %v706 = vpop.f32.mrb[0].mxu0
        %707 = vmatprep.mubr.bf16.mxu0 0
        %708 = vmatmul.mubr.bf16.gmra.mrb[0].mxu0 %v563
        %v709 = vpop.f32.mrb[0].mxu0
        %v710 = vadd.f32 %v508, %v709
        %v711 = vpop.f32.mrb[0].mxu0
        %v712 = vpop.f32.mrb[0].mxu0
        %v713 = vadd.f32 %v508, %v712
        %v714 = vpop.f32.mrb[0].mxu0
        %715 = vmatprep.mubr.bf16.mxu0 0
        %716 = vmatmul.mubr.bf16.gmra.mrb[0].mxu0 %v566
        %v717 = vpop.f32.mrb[0].mxu0
        %v718 = vadd.f32 %v508, %v717
        %v719 = vpop.f32.mrb[0].mxu0
        %v720 = vpop.f32.mrb[0].mxu0
        %v721 = vadd.f32 %v508, %v720
        %v722 = vpop.f32.mrb[0].mxu0
        %723 = vmatprep.mubr.bf16.mxu0 0
        %724 = vmatmul.mubr.bf16.gmra.mrb[0].mxu0 %v569
        %v725 = vpop.f32.mrb[0].mxu0
        %v726 = vadd.f32 %v508, %v725
        %v727 = vpop.f32.mrb[0].mxu0
        %v728 = vpop.f32.mrb[0].mxu0
        %v729 = vadd.f32 %v508, %v728
        %v730 = vpop.f32.mrb[0].mxu0
        %731 = vdwg.mxu0
        %v732 = vmax.f32 %v606, 0.0
        %v733 = vmax.f32 %v609, 0.0
        %v734 = vmax.f32 %v614, 0.0
        %v735 = vmax.f32 %v617, 0.0
        %v736 = vmax.f32 %v622, 0.0
        %v737 = vmax.f32 %v625, 0.0
        %v738 = vmax.f32 %v630, 0.0
        %v739 = vmax.f32 %v633, 0.0
        %v740 = vmax.f32 %v638, 0.0
        %v741 = vmax.f32 %v641, 0.0
        %v742 = vmax.f32 %v646, 0.0
        %v743 = vmax.f32 %v649, 0.0
        %v744 = vmax.f32 %v654, 0.0
        %v745 = vmax.f32 %v657, 0.0
        %v746 = vmax.f32 %v662, 0.0
        %v747 = vmax.f32 %v665, 0.0
        %v748 = vmax.f32 %v670, 0.0
        %v749 = vmax.f32 %v673, 0.0
        %v750 = vmax.f32 %v678, 0.0
        %v751 = vmax.f32 %v681, 0.0
        %v752 = vmax.f32 %v686, 0.0
        %v753 = vmax.f32 %v689, 0.0
        %v754 = vmax.f32 %v694, 0.0
        %v755 = vmax.f32 %v697, 0.0
        %v756 = vmax.f32 %v702, 0.0
        %v757 = vmax.f32 %v705, 0.0
        %v758 = vmax.f32 %v710, 0.0
        %v759 = vmax.f32 %v713, 0.0
        %v760 = vmax.f32 %v718, 0.0
        %v761 = vmax.f32 %v721, 0.0
        %v762 = vmax.f32 %v726, 0.0
        %v763 = vmax.f32 %v729, 0.0
        %s764 = scalar_lea.vmem [#allocation2], 24
        %vm765 = vcmask 130048
        %766 = vst.msk [vmem:[%s764 + $0x1] sm:$0xff] %vm765, %v732
        %767 = vst.msk [vmem:[%s764 + $0x9] sm:$0xff] %vm765, %v733
        %768 = vst.msk [vmem:[%s764 + $0x19] sm:$0xff] %vm765, %v734
        %769 = vst.msk [vmem:[%s764 + $0x21] sm:$0xff] %vm765, %v735
        %770 = vst.msk [vmem:[%s764 + $0x31] sm:$0xff] %vm765, %v736
        %771 = vst.msk [vmem:[%s764 + $0x39] sm:$0xff] %vm765, %v737
        %772 = vst.msk [vmem:[%s764 + $0x49] sm:$0xff] %vm765, %v738
        %773 = vst.msk [vmem:[%s764 + $0x51] sm:$0xff] %vm765, %v739
        %774 = vst.msk [vmem:[%s764 + $0x61] sm:$0xff] %vm765, %v740
        %775 = vst.msk [vmem:[%s764 + $0x69] sm:$0xff] %vm765, %v741
        %776 = vst.msk [vmem:[%s764 + $0x79] sm:$0xff] %vm765, %v742
        %777 = vst.msk [vmem:[%s764 + $0x81] sm:$0xff] %vm765, %v743
        %778 = vst.msk [vmem:[%s764 + $0x91] sm:$0xff] %vm765, %v744
        %779 = vst.msk [vmem:[%s764 + $0x99] sm:$0xff] %vm765, %v745
        %780 = vst.msk [vmem:[%s764 + $0xa9] sm:$0xff] %vm765, %v746
        %781 = vst.msk [vmem:[%s764 + $0xb1] sm:$0xff] %vm765, %v747
        %782 = vst.msk [vmem:[%s764 + $0xc1] sm:$0xff] %vm765, %v748
        %783 = vst.msk [vmem:[%s764 + $0xc9] sm:$0xff] %vm765, %v749
        %784 = vst.msk [vmem:[%s764 + $0xd9] sm:$0xff] %vm765, %v750
        %785 = vst.msk [vmem:[%s764 + $0xe1] sm:$0xff] %vm765, %v751
        %786 = vst.msk [vmem:[%s764 + $0xf1] sm:$0xff] %vm765, %v752
        %787 = vst.msk [vmem:[%s764 + $0xf9] sm:$0xff] %vm765, %v753
        %788 = vst.msk [vmem:[%s764 + $0x109] sm:$0xff] %vm765, %v754
        %789 = vst.msk [vmem:[%s764 + $0x111] sm:$0xff] %vm765, %v755
        %790 = vst.msk [vmem:[%s764 + $0x121] sm:$0xff] %vm765, %v756
        %791 = vst.msk [vmem:[%s764 + $0x129] sm:$0xff] %vm765, %v757
        %792 = vst.msk [vmem:[%s764 + $0x139] sm:$0xff] %vm765, %v758
        %793 = vst.msk [vmem:[%s764 + $0x141] sm:$0xff] %vm765, %v759
        %794 = vst.msk [vmem:[%s764 + $0x151] sm:$0xff] %vm765, %v760
        %795 = vst.msk [vmem:[%s764 + $0x159] sm:$0xff] %vm765, %v761
        %796 = vst.msk [vmem:[%s764 + $0x169] sm:$0xff] %vm765, %v762
        %797 = vst.msk [vmem:[%s764 + $0x171] sm:$0xff] %vm765, %v763
        %v798 = vld [vmem:[%s377] sm:$0xff]
        %v799 = vld [vmem:[%s377 + $0x8] sm:$0xff]
        %v800 = vld [vmem:[%s395] sm:$0xff]
        %v801 = vld [vmem:[%s395 + $0x8] sm:$0xff]
        %v802 = vpack.c.bf16 %v799, %v798
        %v803 = vpack.c.bf16 %v801, %v800
        %v805 = vsel %vm522, %v802, 0
        %v808 = vsel %vm522, %v803, 0
        %810 = vmatprep.subr.bf16.mxu0 0
        %811 = vmatpush1.bf16.msra.mxu0 %v518
        %812 = vmatprep.subr.bf16.mxu0 0
        %813 = vmatpush1.bf16.msra.mxu0 %v519
        %814 = vmatprep.subr.bf16.mxu0 0
        %815 = vmatpush1.bf16.msra.mxu0 0
        %816 = vmatprep.subr.bf16.mxu0 0
        %817 = vmatpush1.bf16.msra.mxu0 0
        %818 = vmatprep.subr.bf16.mxu0 0
        %819 = vmatpush1.bf16.msra.mxu0 0
        %820 = vmatprep.subr.bf16.mxu0 0
        %821 = vmatpush1.bf16.msra.mxu0 0
        %822 = vmatprep.subr.bf16.mxu0 0
        %823 = vmatpush1.bf16.msra.mxu0 0
        %824 = vmatprep.subr.bf16.mxu0 0
        %825 = vmatpush1.bf16.msra.mxu0 0
        %826 = vmatprep.subr.bf16.mxu0 0
        %827 = vmatpush1.bf16.msra.mxu0 0
        %828 = vmatprep.subr.bf16.mxu0 0
        %829 = vmatpush1.bf16.msra.mxu0 0
        %830 = vmatprep.subr.bf16.mxu0 0
        %831 = vmatpush1.bf16.msra.mxu0 0
        %832 = vmatprep.subr.bf16.mxu0 0
        %833 = vmatpush1.bf16.msra.mxu0 0
        %834 = vmatprep.subr.bf16.mxu0 0
        %835 = vmatpush1.bf16.msra.mxu0 0
        %836 = vmatprep.subr.bf16.mxu0 0
        %837 = vmatpush1.bf16.msra.mxu0 0
        %838 = vmatprep.subr.bf16.mxu0 0
        %839 = vmatpush1.bf16.msra.mxu0 0
        %840 = vmatprep.subr.bf16.mxu0 0
        %841 = vmatpush1.bf16.msra.mxu0 0
        %842 = vmatprep.mubr.bf16.mxu0 0
        %843 = vmatmul.mubr.bf16.gmra.mrb[0].mxu0 %v805
        %v844 = vpop.f32.mrb[0].mxu0
        %v845 = vadd.f32 %v508, %v844
        %v846 = vpop.f32.mrb[0].mxu0
        %v847 = vpop.f32.mrb[0].mxu0
        %v848 = vadd.f32 %v508, %v847
        %v849 = vpop.f32.mrb[0].mxu0
        %850 = vmatprep.mubr.bf16.mxu0 0
        %851 = vmatmul.mubr.bf16.gmra.mrb[0].mxu0 %v808
        %v852 = vpop.f32.mrb[0].mxu0
        %v853 = vadd.f32 %v508, %v852
        %v854 = vpop.f32.mrb[0].mxu0
        %v855 = vpop.f32.mrb[0].mxu0
        %v856 = vadd.f32 %v508, %v855
        %v857 = vpop.f32.mrb[0].mxu0
        %858 = vdwg.mxu0
        %v859 = vmax.f32 %v845, 0.0
        %v860 = vmax.f32 %v848, 0.0
        %v861 = vmax.f32 %v853, 0.0
        %v862 = vmax.f32 %v856, 0.0
        %863 = vst.msk [vmem:[#allocation2 + $0x1] sm:$0xff] %vm765, %v859
        %864 = vst.msk [vmem:[#allocation2 + $0x9] sm:$0xff] %vm765, %v860
        %s865 = scalar_lea.vmem [#allocation2], 408
        %866 = vst.msk [vmem:[%s865 + $0x1] sm:$0xff] %vm765, %v861
        %867 = vst.msk [vmem:[%s865 + $0x9] sm:$0xff] %vm765, %v862
        %vm868 = vcmask 122880
        %869 = vst.msk [vmem:[#allocation2] sm:$0x1] %vm868, 0.0
        %870 = vst.msk [vmem:[#allocation2 + $0x18] sm:$0x1] %vm868, 0.0
        %871 = vst.msk [vmem:[#allocation2 + $0x30] sm:$0x1] %vm868, 0.0
        %872 = vst.msk [vmem:[#allocation2 + $0x48] sm:$0x1] %vm868, 0.0
        %873 = vst.msk [vmem:[#allocation2 + $0x60] sm:$0x1] %vm868, 0.0
        %874 = vst.msk [vmem:[#allocation2 + $0x78] sm:$0x1] %vm868, 0.0
        %875 = vst.msk [vmem:[#allocation2 + $0x90] sm:$0x1] %vm868, 0.0
        %876 = vst.msk [vmem:[#allocation2 + $0xa8] sm:$0x1] %vm868, 0.0
        %877 = vst.msk [vmem:[#allocation2 + $0xc0] sm:$0x1] %vm868, 0.0
        %878 = vst.msk [vmem:[#allocation2 + $0xd8] sm:$0x1] %vm868, 0.0
        %879 = vst.msk [vmem:[#allocation2 + $0xf0] sm:$0x1] %vm868, 0.0
        %880 = vst.msk [vmem:[#allocation2 + $0x108] sm:$0x1] %vm868, 0.0
        %881 = vst.msk [vmem:[#allocation2 + $0x120] sm:$0x1] %vm868, 0.0
        %882 = vst.msk [vmem:[#allocation2 + $0x138] sm:$0x1] %vm868, 0.0
        %883 = vst.msk [vmem:[#allocation2 + $0x150] sm:$0x1] %vm868, 0.0
        %884 = vst.msk [vmem:[#allocation2 + $0x168] sm:$0x1] %vm868, 0.0
        %885 = vst.msk [vmem:[#allocation2 + $0x180] sm:$0x1] %vm868, 0.0
        %886 = vst.msk [vmem:[#allocation2 + $0x198] sm:$0x1] %vm868, 0.0
        %887 = vst.msk [vmem:[#allocation2 + $0x11] sm:$0x1] %vm868, 0.0
        %888 = vst.msk [vmem:[#allocation2 + $0x29] sm:$0x1] %vm868, 0.0
        %889 = vst.msk [vmem:[#allocation2 + $0x41] sm:$0x1] %vm868, 0.0
        %890 = vst.msk [vmem:[#allocation2 + $0x59] sm:$0x1] %vm868, 0.0
        %891 = vst.msk [vmem:[#allocation2 + $0x71] sm:$0x1] %vm868, 0.0
        %892 = vst.msk [vmem:[#allocation2 + $0x89] sm:$0x1] %vm868, 0.0
        %893 = vst.msk [vmem:[#allocation2 + $0xa1] sm:$0x1] %vm868, 0.0
        %894 = vst.msk [vmem:[#allocation2 + $0xb9] sm:$0x1] %vm868, 0.0
        %895 = vst.msk [vmem:[#allocation2 + $0xd1] sm:$0x1] %vm868, 0.0
        %896 = vst.msk [vmem:[#allocation2 + $0xe9] sm:$0x1] %vm868, 0.0
        %897 = vst.msk [vmem:[#allocation2 + $0x101] sm:$0x1] %vm868, 0.0
        %898 = vst.msk [vmem:[#allocation2 + $0x119] sm:$0x1] %vm868, 0.0
        %899 = vst.msk [vmem:[#allocation2 + $0x131] sm:$0x1] %vm868, 0.0
        %900 = vst.msk [vmem:[#allocation2 + $0x149] sm:$0x1] %vm868, 0.0
        %901 = vst.msk [vmem:[#allocation2 + $0x161] sm:$0x1] %vm868, 0.0
        %902 = vst.msk [vmem:[#allocation2 + $0x179] sm:$0x1] %vm868, 0.0
        %903 = vst.msk [vmem:[#allocation2 + $0x191] sm:$0x1] %vm868, 0.0
        %904 = vst.msk [vmem:[#allocation2 + $0x1a9] sm:$0x1] %vm868, 0.0
        %p905 = scmp.eq.s32.totalorder %s33, 0
        // Predicated region
        $region65: #{fire_forward.1} parent=47 // pred_check
          %p906 = pneg %p905
        $region66: #{fire_forward.1} parent=47 // pred_check_branch
          %908 = sbr.rel (%p906) target = $region68
        $region67: #{fire_forward.1} parent=47 // pred_region
          %909 = vst.msk [vmem:[#allocation2] sm:$0xff] %vm765, 0.0
          %910 = vst.msk [vmem:[#allocation2 + $0x8] sm:$0xff] %vm765, 0.0
          %vm911 = vcmask 123904
          %912 = vst.msk [vmem:[#allocation2 + $0x10] sm:$0x3] %vm911, 0.0
          %913 = vst.msk [vmem:[%s865] sm:$0xff] %vm765, 0.0
          %914 = vst.msk [vmem:[%s865 + $0x8] sm:$0xff] %vm765, 0.0
          %915 = vst.msk [vmem:[%s865 + $0x10] sm:$0x3] %vm911, 0.0
        $region68: #{fire_forward.1} parent=47 // pred_fallthru
          _
        %v916 = vld [vmem:[#allocation2] sm:$0xff]
        %v917 = vld [vmem:[#allocation2 + $0x8] sm:$0xff]
        %v918 = vld [vmem:[#allocation2 + $0x18] sm:$0xff]
        %v919 = vld [vmem:[#allocation2 + $0x20] sm:$0xff]
        %v920 = vld [vmem:[#allocation2 + $0x30] sm:$0xff]
        %v921 = vld [vmem:[#allocation2 + $0x38] sm:$0xff]
        %v922 = vld [vmem:[#allocation2 + $0x48] sm:$0xff]
        %v923 = vld [vmem:[#allocation2 + $0x50] sm:$0xff]
        %v924 = vld [vmem:[#allocation2 + $0x60] sm:$0xff]
        %v925 = vld [vmem:[#allocation2 + $0x68] sm:$0xff]
        %v926 = vld [vmem:[#allocation2 + $0x78] sm:$0xff]
        %v927 = vld [vmem:[#allocation2 + $0x80] sm:$0xff]
        %v928 = vld [vmem:[#allocation2 + $0x90] sm:$0xff]
        %v929 = vld [vmem:[#allocation2 + $0x98] sm:$0xff]
        %v930 = vld [vmem:[#allocation2 + $0xa8] sm:$0xff]
        %v931 = vld [vmem:[#allocation2 + $0xb0] sm:$0xff]
        %v932 = vld [vmem:[#allocation2 + $0xc0] sm:$0xff]
        %v933 = vld [vmem:[#allocation2 + $0xc8] sm:$0xff]
        %v934 = vld [vmem:[#allocation2 + $0xd8] sm:$0xff]
        %v935 = vld [vmem:[#allocation2 + $0xe0] sm:$0xff]
        %v936 = vld [vmem:[#allocation2 + $0xf0] sm:$0xff]
        %v937 = vld [vmem:[#allocation2 + $0xf8] sm:$0xff]
        %v938 = vld [vmem:[#allocation2 + $0x108] sm:$0xff]
        %v939 = vld [vmem:[#allocation2 + $0x110] sm:$0xff]
        %v940 = vld [vmem:[#allocation2 + $0x120] sm:$0xff]
        %v941 = vld [vmem:[#allocation2 + $0x128] sm:$0xff]
        %v942 = vld [vmem:[#allocation2 + $0x138] sm:$0xff]
        %v943 = vld [vmem:[#allocation2 + $0x140] sm:$0xff]
        %v944 = vld [vmem:[#allocation2 + $0x150] sm:$0xff]
        %v945 = vld [vmem:[#allocation2 + $0x158] sm:$0xff]
        %v946 = vld [vmem:[#allocation2 + $0x168] sm:$0xff]
        %v947 = vld [vmem:[#allocation2 + $0x170] sm:$0xff]
        %v948 = vld [vmem:[#allocation2 + $0x1] sm:$0xff]
        %v949 = vld [vmem:[#allocation2 + $0x9] sm:$0xff]
        %v950 = vld [vmem:[#allocation2 + $0x19] sm:$0xff]
        %v951 = vld [vmem:[#allocation2 + $0x21] sm:$0xff]
        %v952 = vld [vmem:[#allocation2 + $0x31] sm:$0xff]
        %v953 = vld [vmem:[#allocation2 + $0x39] sm:$0xff]
        %v954 = vld [vmem:[#allocation2 + $0x49] sm:$0xff]
        %v955 = vld [vmem:[#allocation2 + $0x51] sm:$0xff]
        %v956 = vld [vmem:[#allocation2 + $0x61] sm:$0xff]
        %v957 = vld [vmem:[#allocation2 + $0x69] sm:$0xff]
        %v958 = vld [vmem:[#allocation2 + $0x79] sm:$0xff]
        %v959 = vld [vmem:[#allocation2 + $0x81] sm:$0xff]
        %v960 = vld [vmem:[#allocation2 + $0x91] sm:$0xff]
        %v961 = vld [vmem:[#allocation2 + $0x99] sm:$0xff]
        %v962 = vld [vmem:[#allocation2 + $0xa9] sm:$0xff]
        %v963 = vld [vmem:[#allocation2 + $0xb1] sm:$0xff]
        %v964 = vld [vmem:[#allocation2 + $0xc1] sm:$0xff]
        %v965 = vld [vmem:[#allocation2 + $0xc9] sm:$0xff]
        %v966 = vld [vmem:[#allocation2 + $0xd9] sm:$0xff]
        %v967 = vld [vmem:[#allocation2 + $0xe1] sm:$0xff]
        %v968 = vld [vmem:[#allocation2 + $0xf1] sm:$0xff]
        %v969 = vld [vmem:[#allocation2 + $0xf9] sm:$0xff]
        %v970 = vld [vmem:[#allocation2 + $0x109] sm:$0xff]
        %v971 = vld [vmem:[#allocation2 + $0x111] sm:$0xff]
        %v972 = vld [vmem:[#allocation2 + $0x121] sm:$0xff]
        %v973 = vld [vmem:[#allocation2 + $0x129] sm:$0xff]
        %v974 = vld [vmem:[#allocation2 + $0x139] sm:$0xff]
        %v975 = vld [vmem:[#allocation2 + $0x141] sm:$0xff]
        %v976 = vld [vmem:[#allocation2 + $0x151] sm:$0xff]
        %v977 = vld [vmem:[#allocation2 + $0x159] sm:$0xff]
        %v978 = vld [vmem:[#allocation2 + $0x169] sm:$0xff]
        %v979 = vld [vmem:[#allocation2 + $0x171] sm:$0xff]
        %v980 = vld [vmem:[#allocation2 + $0x2] sm:$0xff]
        %v981 = vld [vmem:[#allocation2 + $0xa] sm:$0xff]
        %v982 = vld [vmem:[#allocation2 + $0x1a] sm:$0xff]
        %v983 = vld [vmem:[#allocation2 + $0x22] sm:$0xff]
        %v984 = vld [vmem:[#allocation2 + $0x32] sm:$0xff]
        %v985 = vld [vmem:[#allocation2 + $0x3a] sm:$0xff]
        %v986 = vld [vmem:[#allocation2 + $0x4a] sm:$0xff]
        %v987 = vld [vmem:[#allocation2 + $0x52] sm:$0xff]
        %v988 = vld [vmem:[#allocation2 + $0x62] sm:$0xff]
        %v989 = vld [vmem:[#allocation2 + $0x6a] sm:$0xff]
        %v990 = vld [vmem:[#allocation2 + $0x7a] sm:$0xff]
        %v991 = vld [vmem:[#allocation2 + $0x82] sm:$0xff]
        %v992 = vld [vmem:[#allocation2 + $0x92] sm:$0xff]
        %v993 = vld [vmem:[#allocation2 + $0x9a] sm:$0xff]
        %v994 = vld [vmem:[#allocation2 + $0xaa] sm:$0xff]
        %v995 = vld [vmem:[#allocation2 + $0xb2] sm:$0xff]
        %v996 = vld [vmem:[#allocation2 + $0xc2] sm:$0xff]
        %v997 = vld [vmem:[#allocation2 + $0xca] sm:$0xff]
        %v998 = vld [vmem:[#allocation2 + $0xda] sm:$0xff]
        %v999 = vld [vmem:[#allocation2 + $0xe2] sm:$0xff]
        %v1000 = vld [vmem:[#allocation2 + $0xf2] sm:$0xff]
        %v1001 = vld [vmem:[#allocation2 + $0xfa] sm:$0xff]
        %v1002 = vld [vmem:[#allocation2 + $0x10a] sm:$0xff]
        %v1003 = vld [vmem:[#allocation2 + $0x112] sm:$0xff]
        %v1004 = vld [vmem:[#allocation2 + $0x122] sm:$0xff]
        %v1005 = vld [vmem:[#allocation2 + $0x12a] sm:$0xff]
        %v1006 = vld [vmem:[#allocation2 + $0x13a] sm:$0xff]
        %v1007 = vld [vmem:[#allocation2 + $0x142] sm:$0xff]
        %v1008 = vld [vmem:[#allocation2 + $0x152] sm:$0xff]
        %v1009 = vld [vmem:[#allocation2 + $0x15a] sm:$0xff]
        %v1010 = vld [vmem:[#allocation2 + $0x16a] sm:$0xff]
        %v1011 = vld [vmem:[#allocation2 + $0x172] sm:$0xff]
        %v1012 = vld [vmem:[%s764] sm:$0xff]
        %v1013 = vld [vmem:[%s764 + $0x8] sm:$0xff]
        %v1014 = vld [vmem:[%s764 + $0x18] sm:$0xff]
        %v1015 = vld [vmem:[%s764 + $0x20] sm:$0xff]
        %v1016 = vld [vmem:[%s764 + $0x30] sm:$0xff]
        %v1017 = vld [vmem:[%s764 + $0x38] sm:$0xff]
        %v1018 = vld [vmem:[%s764 + $0x48] sm:$0xff]
        %v1019 = vld [vmem:[%s764 + $0x50] sm:$0xff]
        %v1020 = vld [vmem:[%s764 + $0x60] sm:$0xff]
        %v1021 = vld [vmem:[%s764 + $0x68] sm:$0xff]
        %v1022 = vld [vmem:[%s764 + $0x78] sm:$0xff]
        %v1023 = vld [vmem:[%s764 + $0x80] sm:$0xff]
        %v1024 = vld [vmem:[%s764 + $0x90] sm:$0xff]
        %v1025 = vld [vmem:[%s764 + $0x98] sm:$0xff]
        %v1026 = vld [vmem:[%s764 + $0xa8] sm:$0xff]
        %v1027 = vld [vmem:[%s764 + $0xb0] sm:$0xff]
        %v1028 = vld [vmem:[%s764 + $0xc0] sm:$0xff]
        %v1029 = vld [vmem:[%s764 + $0xc8] sm:$0xff]
        %v1030 = vld [vmem:[%s764 + $0xd8] sm:$0xff]
        %v1031 = vld [vmem:[%s764 + $0xe0] sm:$0xff]
        %v1032 = vld [vmem:[%s764 + $0xf0] sm:$0xff]
        %v1033 = vld [vmem:[%s764 + $0xf8] sm:$0xff]
        %v1034 = vld [vmem:[%s764 + $0x108] sm:$0xff]
        %v1035 = vld [vmem:[%s764 + $0x110] sm:$0xff]
        %v1036 = vld [vmem:[%s764 + $0x120] sm:$0xff]
        %v1037 = vld [vmem:[%s764 + $0x128] sm:$0xff]
        %v1038 = vld [vmem:[%s764 + $0x138] sm:$0xff]
        %v1039 = vld [vmem:[%s764 + $0x140] sm:$0xff]
        %v1040 = vld [vmem:[%s764 + $0x150] sm:$0xff]
        %v1041 = vld [vmem:[%s764 + $0x158] sm:$0xff]
        %v1042 = vld [vmem:[%s764 + $0x168] sm:$0xff]
        %v1043 = vld [vmem:[%s764 + $0x170] sm:$0xff]
        %v1044 = vld [vmem:[%s764 + $0x1] sm:$0xff]
        %v1045 = vld [vmem:[%s764 + $0x9] sm:$0xff]
        %v1046 = vld [vmem:[%s764 + $0x19] sm:$0xff]
        %v1047 = vld [vmem:[%s764 + $0x21] sm:$0xff]
        %v1048 = vld [vmem:[%s764 + $0x31] sm:$0xff]
        %v1049 = vld [vmem:[%s764 + $0x39] sm:$0xff]
        %v1050 = vld [vmem:[%s764 + $0x49] sm:$0xff]
        %v1051 = vld [vmem:[%s764 + $0x51] sm:$0xff]
        %v1052 = vld [vmem:[%s764 + $0x61] sm:$0xff]
        %v1053 = vld [vmem:[%s764 + $0x69] sm:$0xff]
        %v1054 = vld [vmem:[%s764 + $0x79] sm:$0xff]
        %v1055 = vld [vmem:[%s764 + $0x81] sm:$0xff]
        %v1056 = vld [vmem:[%s764 + $0x91] sm:$0xff]
        %v1057 = vld [vmem:[%s764 + $0x99] sm:$0xff]
        %v1058 = vld [vmem:[%s764 + $0xa9] sm:$0xff]
        %v1059 = vld [vmem:[%s764 + $0xb1] sm:$0xff]
        %v1060 = vld [vmem:[%s764 + $0xc1] sm:$0xff]
        %v1061 = vld [vmem:[%s764 + $0xc9] sm:$0xff]
        %v1062 = vld [vmem:[%s764 + $0xd9] sm:$0xff]
        %v1063 = vld [vmem:[%s764 + $0xe1] sm:$0xff]
        %v1064 = vld [vmem:[%s764 + $0xf1] sm:$0xff]
        %v1065 = vld [vmem:[%s764 + $0xf9] sm:$0xff]
        %v1066 = vld [vmem:[%s764 + $0x109] sm:$0xff]
        %v1067 = vld [vmem:[%s764 + $0x111] sm:$0xff]
        %v1068 = vld [vmem:[%s764 + $0x121] sm:$0xff]
        %v1069 = vld [vmem:[%s764 + $0x129] sm:$0xff]
        %v1070 = vld [vmem:[%s764 + $0x139] sm:$0xff]
        %v1071 = vld [vmem:[%s764 + $0x141] sm:$0xff]
        %v1072 = vld [vmem:[%s764 + $0x151] sm:$0xff]
        %v1073 = vld [vmem:[%s764 + $0x159] sm:$0xff]
        %v1074 = vld [vmem:[%s764 + $0x169] sm:$0xff]
        %v1075 = vld [vmem:[%s764 + $0x171] sm:$0xff]
        %v1076 = vld [vmem:[%s764 + $0x2] sm:$0xff]
        %v1077 = vld [vmem:[%s764 + $0xa] sm:$0xff]
        %v1078 = vld [vmem:[%s764 + $0x1a] sm:$0xff]
        %v1079 = vld [vmem:[%s764 + $0x22] sm:$0xff]
        %v1080 = vld [vmem:[%s764 + $0x32] sm:$0xff]
        %v1081 = vld [vmem:[%s764 + $0x3a] sm:$0xff]
        %v1082 = vld [vmem:[%s764 + $0x4a] sm:$0xff]
        %v1083 = vld [vmem:[%s764 + $0x52] sm:$0xff]
        %v1084 = vld [vmem:[%s764 + $0x62] sm:$0xff]
        %v1085 = vld [vmem:[%s764 + $0x6a] sm:$0xff]
        %v1086 = vld [vmem:[%s764 + $0x7a] sm:$0xff]
        %v1087 = vld [vmem:[%s764 + $0x82] sm:$0xff]
        %v1088 = vld [vmem:[%s764 + $0x92] sm:$0xff]
        %v1089 = vld [vmem:[%s764 + $0x9a] sm:$0xff]
        %v1090 = vld [vmem:[%s764 + $0xaa] sm:$0xff]
        %v1091 = vld [vmem:[%s764 + $0xb2] sm:$0xff]
        %v1092 = vld [vmem:[%s764 + $0xc2] sm:$0xff]
        %v1093 = vld [vmem:[%s764 + $0xca] sm:$0xff]
        %v1094 = vld [vmem:[%s764 + $0xda] sm:$0xff]
        %v1095 = vld [vmem:[%s764 + $0xe2] sm:$0xff]
        %v1096 = vld [vmem:[%s764 + $0xf2] sm:$0xff]
        %v1097 = vld [vmem:[%s764 + $0xfa] sm:$0xff]
        %v1098 = vld [vmem:[%s764 + $0x10a] sm:$0xff]
        %v1099 = vld [vmem:[%s764 + $0x112] sm:$0xff]
        %v1100 = vld [vmem:[%s764 + $0x122] sm:$0xff]
        %v1101 = vld [vmem:[%s764 + $0x12a] sm:$0xff]
        %v1102 = vld [vmem:[%s764 + $0x13a] sm:$0xff]
        %v1103 = vld [vmem:[%s764 + $0x142] sm:$0xff]
        %v1104 = vld [vmem:[%s764 + $0x152] sm:$0xff]
        %v1105 = vld [vmem:[%s764 + $0x15a] sm:$0xff]
        %v1106 = vld [vmem:[%s764 + $0x16a] sm:$0xff]
        %v1107 = vld [vmem:[%s764 + $0x172] sm:$0xff]
        %s1108 = scalar_lea.vmem [#allocation2], 48
        %v1109 = vld [vmem:[%s1108] sm:$0xff]
        %v1110 = vld [vmem:[%s1108 + $0x8] sm:$0xff]
        %v1111 = vld [vmem:[%s1108 + $0x18] sm:$0xff]
        %v1112 = vld [vmem:[%s1108 + $0x20] sm:$0xff]
        %v1113 = vld [vmem:[%s1108 + $0x30] sm:$0xff]
        %v1114 = vld [vmem:[%s1108 + $0x38] sm:$0xff]
        %v1115 = vld [vmem:[%s1108 + $0x48] sm:$0xff]
        %v1116 = vld [vmem:[%s1108 + $0x50] sm:$0xff]
        %v1117 = vld [vmem:[%s1108 + $0x60] sm:$0xff]
        %v1118 = vld [vmem:[%s1108 + $0x68] sm:$0xff]
        %v1119 = vld [vmem:[%s1108 + $0x78] sm:$0xff]
        %v1120 = vld [vmem:[%s1108 + $0x80] sm:$0xff]
        %v1121 = vld [vmem:[%s1108 + $0x90] sm:$0xff]
        %v1122 = vld [vmem:[%s1108 + $0x98] sm:$0xff]
        %v1123 = vld [vmem:[%s1108 + $0xa8] sm:$0xff]
        %v1124 = vld [vmem:[%s1108 + $0xb0] sm:$0xff]
        %v1125 = vld [vmem:[%s1108 + $0xc0] sm:$0xff]
        %v1126 = vld [vmem:[%s1108 + $0xc8] sm:$0xff]
        %v1127 = vld [vmem:[%s1108 + $0xd8] sm:$0xff]
        %v1128 = vld [vmem:[%s1108 + $0xe0] sm:$0xff]
        %v1129 = vld [vmem:[%s1108 + $0xf0] sm:$0xff]
        %v1130 = vld [vmem:[%s1108 + $0xf8] sm:$0xff]
        %v1131 = vld [vmem:[%s1108 + $0x108] sm:$0xff]
        %v1132 = vld [vmem:[%s1108 + $0x110] sm:$0xff]
        %v1133 = vld [vmem:[%s1108 + $0x120] sm:$0xff]
        %v1134 = vld [vmem:[%s1108 + $0x128] sm:$0xff]
        %v1135 = vld [vmem:[%s1108 + $0x138] sm:$0xff]
        %v1136 = vld [vmem:[%s1108 + $0x140] sm:$0xff]
        %v1137 = vld [vmem:[%s1108 + $0x150] sm:$0xff]
        %v1138 = vld [vmem:[%s1108 + $0x158] sm:$0xff]
        %v1139 = vld [vmem:[%s1108 + $0x168] sm:$0xff]
        %v1140 = vld [vmem:[%s1108 + $0x170] sm:$0xff]
        %v1141 = vld [vmem:[%s1108 + $0x1] sm:$0xff]
        %v1142 = vld [vmem:[%s1108 + $0x9] sm:$0xff]
        %v1143 = vld [vmem:[%s1108 + $0x19] sm:$0xff]
        %v1144 = vld [vmem:[%s1108 + $0x21] sm:$0xff]
        %v1145 = vld [vmem:[%s1108 + $0x31] sm:$0xff]
        %v1146 = vld [vmem:[%s1108 + $0x39] sm:$0xff]
        %v1147 = vld [vmem:[%s1108 + $0x49] sm:$0xff]
        %v1148 = vld [vmem:[%s1108 + $0x51] sm:$0xff]
        %v1149 = vld [vmem:[%s1108 + $0x61] sm:$0xff]
        %v1150 = vld [vmem:[%s1108 + $0x69] sm:$0xff]
        %v1151 = vld [vmem:[%s1108 + $0x79] sm:$0xff]
        %v1152 = vld [vmem:[%s1108 + $0x81] sm:$0xff]
        %v1153 = vld [vmem:[%s1108 + $0x91] sm:$0xff]
        %v1154 = vld [vmem:[%s1108 + $0x99] sm:$0xff]
        %v1155 = vld [vmem:[%s1108 + $0xa9] sm:$0xff]
        %v1156 = vld [vmem:[%s1108 + $0xb1] sm:$0xff]
        %v1157 = vld [vmem:[%s1108 + $0xc1] sm:$0xff]
        %v1158 = vld [vmem:[%s1108 + $0xc9] sm:$0xff]
        %v1159 = vld [vmem:[%s1108 + $0xd9] sm:$0xff]
        %v1160 = vld [vmem:[%s1108 + $0xe1] sm:$0xff]
        %v1161 = vld [vmem:[%s1108 + $0xf1] sm:$0xff]
        %v1162 = vld [vmem:[%s1108 + $0xf9] sm:$0xff]
        %v1163 = vld [vmem:[%s1108 + $0x109] sm:$0xff]
        %v1164 = vld [vmem:[%s1108 + $0x111] sm:$0xff]
        %v1165 = vld [vmem:[%s1108 + $0x121] sm:$0xff]
        %v1166 = vld [vmem:[%s1108 + $0x129] sm:$0xff]
        %v1167 = vld [vmem:[%s1108 + $0x139] sm:$0xff]
        %v1168 = vld [vmem:[%s1108 + $0x141] sm:$0xff]
        %v1169 = vld [vmem:[%s1108 + $0x151] sm:$0xff]
        %v1170 = vld [vmem:[%s1108 + $0x159] sm:$0xff]
        %v1171 = vld [vmem:[%s1108 + $0x169] sm:$0xff]
        %v1172 = vld [vmem:[%s1108 + $0x171] sm:$0xff]
        %v1173 = vld [vmem:[%s1108 + $0x2] sm:$0xff]
        %v1174 = vld [vmem:[%s1108 + $0xa] sm:$0xff]
        %v1175 = vld [vmem:[%s1108 + $0x1a] sm:$0xff]
        %v1176 = vld [vmem:[%s1108 + $0x22] sm:$0xff]
        %v1177 = vld [vmem:[%s1108 + $0x32] sm:$0xff]
        %v1178 = vld [vmem:[%s1108 + $0x3a] sm:$0xff]
        %v1179 = vld [vmem:[%s1108 + $0x4a] sm:$0xff]
        %v1180 = vld [vmem:[%s1108 + $0x52] sm:$0xff]
        %v1181 = vld [vmem:[%s1108 + $0x62] sm:$0xff]
        %v1182 = vld [vmem:[%s1108 + $0x6a] sm:$0xff]
        %v1183 = vld [vmem:[%s1108 + $0x7a] sm:$0xff]
        %v1184 = vld [vmem:[%s1108 + $0x82] sm:$0xff]
        %v1185 = vld [vmem:[%s1108 + $0x92] sm:$0xff]
        %v1186 = vld [vmem:[%s1108 + $0x9a] sm:$0xff]
        %v1187 = vld [vmem:[%s1108 + $0xaa] sm:$0xff]
        %v1188 = vld [vmem:[%s1108 + $0xb2] sm:$0xff]
        %v1189 = vld [vmem:[%s1108 + $0xc2] sm:$0xff]
        %v1190 = vld [vmem:[%s1108 + $0xca] sm:$0xff]
        %v1191 = vld [vmem:[%s1108 + $0xda] sm:$0xff]
        %v1192 = vld [vmem:[%s1108 + $0xe2] sm:$0xff]
        %v1193 = vld [vmem:[%s1108 + $0xf2] sm:$0xff]
        %v1194 = vld [vmem:[%s1108 + $0xfa] sm:$0xff]
        %v1195 = vld [vmem:[%s1108 + $0x10a] sm:$0xff]
        %v1196 = vld [vmem:[%s1108 + $0x112] sm:$0xff]
        %v1197 = vld [vmem:[%s1108 + $0x122] sm:$0xff]
        %v1198 = vld [vmem:[%s1108 + $0x12a] sm:$0xff]
        %v1199 = vld [vmem:[%s1108 + $0x13a] sm:$0xff]
        %v1200 = vld [vmem:[%s1108 + $0x142] sm:$0xff]
        %v1201 = vld [vmem:[%s1108 + $0x152] sm:$0xff]
        %v1202 = vld [vmem:[%s1108 + $0x15a] sm:$0xff]
        %v1203 = vld [vmem:[%s1108 + $0x16a] sm:$0xff]
        %v1204 = vld [vmem:[%s1108 + $0x172] sm:$0xff]
        %1237 = vrot.lane.b32.xlu0 %v948, 16
        %v1238 = vpop.permute.xlu0 %1237
        %1239 = vrot.lane.b32.xlu0 %v949, 16
        %v1240 = vpop.permute.xlu0 %1239
        %1241 = vrot.lane.b32.xlu0 %v950, 16
        %v1242 = vpop.permute.xlu0 %1241
        %1243 = vrot.lane.b32.xlu0 %v951, 16
        %v1244 = vpop.permute.xlu0 %1243
        %1245 = vrot.lane.b32.xlu0 %v952, 16
        %v1246 = vpop.permute.xlu0 %1245
        %1247 = vrot.lane.b32.xlu0 %v953, 16
        %v1248 = vpop.permute.xlu0 %1247
        %1249 = vrot.lane.b32.xlu0 %v954, 16
        %v1250 = vpop.permute.xlu0 %1249
        %1251 = vrot.lane.b32.xlu0 %v955, 16
        %v1252 = vpop.permute.xlu0 %1251
        %1253 = vrot.lane.b32.xlu0 %v956, 16
        %v1254 = vpop.permute.xlu0 %1253
        %1255 = vrot.lane.b32.xlu0 %v957, 16
        %v1256 = vpop.permute.xlu0 %1255
        %1257 = vrot.lane.b32.xlu0 %v958, 16
        %v1258 = vpop.permute.xlu0 %1257
        %1259 = vrot.lane.b32.xlu0 %v959, 16
        %v1260 = vpop.permute.xlu0 %1259
        %1261 = vrot.lane.b32.xlu0 %v960, 16
        %v1262 = vpop.permute.xlu0 %1261
        %1263 = vrot.lane.b32.xlu0 %v961, 16
        %v1264 = vpop.permute.xlu0 %1263
        %1265 = vrot.lane.b32.xlu0 %v962, 16
        %v1266 = vpop.permute.xlu0 %1265
        %1267 = vrot.lane.b32.xlu0 %v963, 16
        %v1268 = vpop.permute.xlu0 %1267
        %1269 = vrot.lane.b32.xlu0 %v964, 16
        %v1270 = vpop.permute.xlu0 %1269
        %1271 = vrot.lane.b32.xlu0 %v965, 16
        %v1272 = vpop.permute.xlu0 %1271
        %1273 = vrot.lane.b32.xlu0 %v966, 16
        %v1274 = vpop.permute.xlu0 %1273
        %1275 = vrot.lane.b32.xlu0 %v967, 16
        %v1276 = vpop.permute.xlu0 %1275
        %1277 = vrot.lane.b32.xlu0 %v968, 16
        %v1278 = vpop.permute.xlu0 %1277
        %1279 = vrot.lane.b32.xlu0 %v969, 16
        %v1280 = vpop.permute.xlu0 %1279
        %1281 = vrot.lane.b32.xlu0 %v970, 16
        %v1282 = vpop.permute.xlu0 %1281
        %1283 = vrot.lane.b32.xlu0 %v971, 16
        %v1284 = vpop.permute.xlu0 %1283
        %1285 = vrot.lane.b32.xlu0 %v972, 16
        %v1286 = vpop.permute.xlu0 %1285
        %1287 = vrot.lane.b32.xlu0 %v973, 16
        %v1288 = vpop.permute.xlu0 %1287
        %1289 = vrot.lane.b32.xlu0 %v974, 16
        %v1290 = vpop.permute.xlu0 %1289
        %1291 = vrot.lane.b32.xlu0 %v975, 16
        %v1292 = vpop.permute.xlu0 %1291
        %1293 = vrot.lane.b32.xlu0 %v976, 16
        %v1294 = vpop.permute.xlu0 %1293
        %1295 = vrot.lane.b32.xlu0 %v977, 16
        %v1296 = vpop.permute.xlu0 %1295
        %1297 = vrot.lane.b32.xlu0 %v978, 16
        %v1298 = vpop.permute.xlu0 %1297
        %1299 = vrot.lane.b32.xlu0 %v979, 16
        %v1300 = vpop.permute.xlu0 %1299
        %1365 = vrot.lane.b32.xlu0 %v980, 32
        %v1366 = vpop.permute.xlu0 %1365
        %1367 = vrot.lane.b32.xlu0 %v981, 32
        %v1368 = vpop.permute.xlu0 %1367
        %1369 = vrot.lane.b32.xlu0 %v982, 32
        %v1370 = vpop.permute.xlu0 %1369
        %1371 = vrot.lane.b32.xlu0 %v983, 32
        %v1372 = vpop.permute.xlu0 %1371
        %1373 = vrot.lane.b32.xlu0 %v984, 32
        %v1374 = vpop.permute.xlu0 %1373
        %1375 = vrot.lane.b32.xlu0 %v985, 32
        %v1376 = vpop.permute.xlu0 %1375
        %1377 = vrot.lane.b32.xlu0 %v986, 32
        %v1378 = vpop.permute.xlu0 %1377
        %1379 = vrot.lane.b32.xlu0 %v987, 32
        %v1380 = vpop.permute.xlu0 %1379
        %1381 = vrot.lane.b32.xlu0 %v988, 32
        %v1382 = vpop.permute.xlu0 %1381
        %1383 = vrot.lane.b32.xlu0 %v989, 32
        %v1384 = vpop.permute.xlu0 %1383
        %1385 = vrot.lane.b32.xlu0 %v990, 32
        %v1386 = vpop.permute.xlu0 %1385
        %1387 = vrot.lane.b32.xlu0 %v991, 32
        %v1388 = vpop.permute.xlu0 %1387
        %1389 = vrot.lane.b32.xlu0 %v992, 32
        %v1390 = vpop.permute.xlu0 %1389
        %1391 = vrot.lane.b32.xlu0 %v993, 32
        %v1392 = vpop.permute.xlu0 %1391
        %1393 = vrot.lane.b32.xlu0 %v994, 32
        %v1394 = vpop.permute.xlu0 %1393
        %1395 = vrot.lane.b32.xlu0 %v995, 32
        %v1396 = vpop.permute.xlu0 %1395
        %1397 = vrot.lane.b32.xlu0 %v996, 32
        %v1398 = vpop.permute.xlu0 %1397
        %1399 = vrot.lane.b32.xlu0 %v997, 32
        %v1400 = vpop.permute.xlu0 %1399
        %1401 = vrot.lane.b32.xlu0 %v998, 32
        %v1402 = vpop.permute.xlu0 %1401
        %1403 = vrot.lane.b32.xlu0 %v999, 32
        %v1404 = vpop.permute.xlu0 %1403
        %1405 = vrot.lane.b32.xlu0 %v1000, 32
        %v1406 = vpop.permute.xlu0 %1405
        %1407 = vrot.lane.b32.xlu0 %v1001, 32
        %v1408 = vpop.permute.xlu0 %1407
        %1409 = vrot.lane.b32.xlu0 %v1002, 32
        %v1410 = vpop.permute.xlu0 %1409
        %1411 = vrot.lane.b32.xlu0 %v1003, 32
        %v1412 = vpop.permute.xlu0 %1411
        %1413 = vrot.lane.b32.xlu0 %v1004, 32
        %v1414 = vpop.permute.xlu0 %1413
        %1415 = vrot.lane.b32.xlu0 %v1005, 32
        %v1416 = vpop.permute.xlu0 %1415
        %1417 = vrot.lane.b32.xlu0 %v1006, 32
        %v1418 = vpop.permute.xlu0 %1417
        %1419 = vrot.lane.b32.xlu0 %v1007, 32
        %v1420 = vpop.permute.xlu0 %1419
        %1421 = vrot.lane.b32.xlu0 %v1008, 32
        %v1422 = vpop.permute.xlu0 %1421
        %1423 = vrot.lane.b32.xlu0 %v1009, 32
        %v1424 = vpop.permute.xlu0 %1423
        %1425 = vrot.lane.b32.xlu0 %v1010, 32
        %v1426 = vpop.permute.xlu0 %1425
        %1427 = vrot.lane.b32.xlu0 %v1011, 32
        %v1428 = vpop.permute.xlu0 %1427
        %1493 = vrot.lane.b32.xlu0 %v1012, 48
        %v1494 = vpop.permute.xlu0 %1493
        %1495 = vrot.lane.b32.xlu0 %v1013, 48
        %v1496 = vpop.permute.xlu0 %1495
        %1497 = vrot.lane.b32.xlu0 %v1014, 48
        %v1498 = vpop.permute.xlu0 %1497
        %1499 = vrot.lane.b32.xlu0 %v1015, 48
        %v1500 = vpop.permute.xlu0 %1499
        %1501 = vrot.lane.b32.xlu0 %v1016, 48
        %v1502 = vpop.permute.xlu0 %1501
        %1503 = vrot.lane.b32.xlu0 %v1017, 48
        %v1504 = vpop.permute.xlu0 %1503
        %1505 = vrot.lane.b32.xlu0 %v1018, 48
        %v1506 = vpop.permute.xlu0 %1505
        %1507 = vrot.lane.b32.xlu0 %v1019, 48
        %v1508 = vpop.permute.xlu0 %1507
        %1509 = vrot.lane.b32.xlu0 %v1020, 48
        %v1510 = vpop.permute.xlu0 %1509
        %1511 = vrot.lane.b32.xlu0 %v1021, 48
        %v1512 = vpop.permute.xlu0 %1511
        %1513 = vrot.lane.b32.xlu0 %v1022, 48
        %v1514 = vpop.permute.xlu0 %1513
        %1515 = vrot.lane.b32.xlu0 %v1023, 48
        %v1516 = vpop.permute.xlu0 %1515
        %1517 = vrot.lane.b32.xlu0 %v1024, 48
        %v1518 = vpop.permute.xlu0 %1517
        %1519 = vrot.lane.b32.xlu0 %v1025, 48
        %v1520 = vpop.permute.xlu0 %1519
        %1521 = vrot.lane.b32.xlu0 %v1026, 48
        %v1522 = vpop.permute.xlu0 %1521
        %1523 = vrot.lane.b32.xlu0 %v1027, 48
        %v1524 = vpop.permute.xlu0 %1523
        %1525 = vrot.lane.b32.xlu0 %v1028, 48
        %v1526 = vpop.permute.xlu0 %1525
        %1527 = vrot.lane.b32.xlu0 %v1029, 48
        %v1528 = vpop.permute.xlu0 %1527
        %1529 = vrot.lane.b32.xlu0 %v1030, 48
        %v1530 = vpop.permute.xlu0 %1529
        %1531 = vrot.lane.b32.xlu0 %v1031, 48
        %v1532 = vpop.permute.xlu0 %1531
        %1533 = vrot.lane.b32.xlu0 %v1032, 48
        %v1534 = vpop.permute.xlu0 %1533
        %1535 = vrot.lane.b32.xlu0 %v1033, 48
        %v1536 = vpop.permute.xlu0 %1535
        %1537 = vrot.lane.b32.xlu0 %v1034, 48
        %v1538 = vpop.permute.xlu0 %1537
        %1539 = vrot.lane.b32.xlu0 %v1035, 48
        %v1540 = vpop.permute.xlu0 %1539
        %1541 = vrot.lane.b32.xlu0 %v1036, 48
        %v1542 = vpop.permute.xlu0 %1541
        %1543 = vrot.lane.b32.xlu0 %v1037, 48
        %v1544 = vpop.permute.xlu0 %1543
        %1545 = vrot.lane.b32.xlu0 %v1038, 48
        %v1546 = vpop.permute.xlu0 %1545
        %1547 = vrot.lane.b32.xlu0 %v1039, 48
        %v1548 = vpop.permute.xlu0 %1547
        %1549 = vrot.lane.b32.xlu0 %v1040, 48
        %v1550 = vpop.permute.xlu0 %1549
        %1551 = vrot.lane.b32.xlu0 %v1041, 48
        %v1552 = vpop.permute.xlu0 %1551
        %1553 = vrot.lane.b32.xlu0 %v1042, 48
        %v1554 = vpop.permute.xlu0 %1553
        %1555 = vrot.lane.b32.xlu0 %v1043, 48
        %v1556 = vpop.permute.xlu0 %1555
        %1621 = vrot.lane.b32.xlu0 %v1044, 64
        %v1622 = vpop.permute.xlu0 %1621
        %1623 = vrot.lane.b32.xlu0 %v1045, 64
        %v1624 = vpop.permute.xlu0 %1623
        %1625 = vrot.lane.b32.xlu0 %v1046, 64
        %v1626 = vpop.permute.xlu0 %1625
        %1627 = vrot.lane.b32.xlu0 %v1047, 64
        %v1628 = vpop.permute.xlu0 %1627
        %1629 = vrot.lane.b32.xlu0 %v1048, 64
        %v1630 = vpop.permute.xlu0 %1629
        %1631 = vrot.lane.b32.xlu0 %v1049, 64
        %v1632 = vpop.permute.xlu0 %1631
        %1633 = vrot.lane.b32.xlu0 %v1050, 64
        %v1634 = vpop.permute.xlu0 %1633
        %1635 = vrot.lane.b32.xlu0 %v1051, 64
        %v1636 = vpop.permute.xlu0 %1635
        %1637 = vrot.lane.b32.xlu0 %v1052, 64
        %v1638 = vpop.permute.xlu0 %1637
        %1639 = vrot.lane.b32.xlu0 %v1053, 64
        %v1640 = vpop.permute.xlu0 %1639
        %1641 = vrot.lane.b32.xlu0 %v1054, 64
        %v1642 = vpop.permute.xlu0 %1641
        %1643 = vrot.lane.b32.xlu0 %v1055, 64
        %v1644 = vpop.permute.xlu0 %1643
        %1645 = vrot.lane.b32.xlu0 %v1056, 64
        %v1646 = vpop.permute.xlu0 %1645
        %1647 = vrot.lane.b32.xlu0 %v1057, 64
        %v1648 = vpop.permute.xlu0 %1647
        %1649 = vrot.lane.b32.xlu0 %v1058, 64
        %v1650 = vpop.permute.xlu0 %1649
        %1651 = vrot.lane.b32.xlu0 %v1059, 64
        %v1652 = vpop.permute.xlu0 %1651
        %1653 = vrot.lane.b32.xlu0 %v1060, 64
        %v1654 = vpop.permute.xlu0 %1653
        %1655 = vrot.lane.b32.xlu0 %v1061, 64
        %v1656 = vpop.permute.xlu0 %1655
        %1657 = vrot.lane.b32.xlu0 %v1062, 64
        %v1658 = vpop.permute.xlu0 %1657
        %1659 = vrot.lane.b32.xlu0 %v1063, 64
        %v1660 = vpop.permute.xlu0 %1659
        %1661 = vrot.lane.b32.xlu0 %v1064, 64
        %v1662 = vpop.permute.xlu0 %1661
        %1663 = vrot.lane.b32.xlu0 %v1065, 64
        %v1664 = vpop.permute.xlu0 %1663
        %1665 = vrot.lane.b32.xlu0 %v1066, 64
        %v1666 = vpop.permute.xlu0 %1665
        %1667 = vrot.lane.b32.xlu0 %v1067, 64
        %v1668 = vpop.permute.xlu0 %1667
        %1669 = vrot.lane.b32.xlu0 %v1068, 64
        %v1670 = vpop.permute.xlu0 %1669
        %1671 = vrot.lane.b32.xlu0 %v1069, 64
        %v1672 = vpop.permute.xlu0 %1671
        %1673 = vrot.lane.b32.xlu0 %v1070, 64
        %v1674 = vpop.permute.xlu0 %1673
        %1675 = vrot.lane.b32.xlu0 %v1071, 64
        %v1676 = vpop.permute.xlu0 %1675
        %1677 = vrot.lane.b32.xlu0 %v1072, 64
        %v1678 = vpop.permute.xlu0 %1677
        %1679 = vrot.lane.b32.xlu0 %v1073, 64
        %v1680 = vpop.permute.xlu0 %1679
        %1681 = vrot.lane.b32.xlu0 %v1074, 64
        %v1682 = vpop.permute.xlu0 %1681
        %1683 = vrot.lane.b32.xlu0 %v1075, 64
        %v1684 = vpop.permute.xlu0 %1683
        %1749 = vrot.lane.b32.xlu0 %v1076, 80
        %v1750 = vpop.permute.xlu0 %1749
        %1751 = vrot.lane.b32.xlu0 %v1077, 80
        %v1752 = vpop.permute.xlu0 %1751
        %1753 = vrot.lane.b32.xlu0 %v1078, 80
        %v1754 = vpop.permute.xlu0 %1753
        %1755 = vrot.lane.b32.xlu0 %v1079, 80
        %v1756 = vpop.permute.xlu0 %1755
        %1757 = vrot.lane.b32.xlu0 %v1080, 80
        %v1758 = vpop.permute.xlu0 %1757
        %1759 = vrot.lane.b32.xlu0 %v1081, 80
        %v1760 = vpop.permute.xlu0 %1759
        %1761 = vrot.lane.b32.xlu0 %v1082, 80
        %v1762 = vpop.permute.xlu0 %1761
        %1763 = vrot.lane.b32.xlu0 %v1083, 80
        %v1764 = vpop.permute.xlu0 %1763
        %1765 = vrot.lane.b32.xlu0 %v1084, 80
        %v1766 = vpop.permute.xlu0 %1765
        %1767 = vrot.lane.b32.xlu0 %v1085, 80
        %v1768 = vpop.permute.xlu0 %1767
        %1769 = vrot.lane.b32.xlu0 %v1086, 80
        %v1770 = vpop.permute.xlu0 %1769
        %1771 = vrot.lane.b32.xlu0 %v1087, 80
        %v1772 = vpop.permute.xlu0 %1771
        %1773 = vrot.lane.b32.xlu0 %v1088, 80
        %v1774 = vpop.permute.xlu0 %1773
        %1775 = vrot.lane.b32.xlu0 %v1089, 80
        %v1776 = vpop.permute.xlu0 %1775
        %1777 = vrot.lane.b32.xlu0 %v1090, 80
        %v1778 = vpop.permute.xlu0 %1777
        %1779 = vrot.lane.b32.xlu0 %v1091, 80
        %v1780 = vpop.permute.xlu0 %1779
        %1781 = vrot.lane.b32.xlu0 %v1092, 80
        %v1782 = vpop.permute.xlu0 %1781
        %1783 = vrot.lane.b32.xlu0 %v1093, 80
        %v1784 = vpop.permute.xlu0 %1783
        %1785 = vrot.lane.b32.xlu0 %v1094, 80
        %v1786 = vpop.permute.xlu0 %1785
        %1787 = vrot.lane.b32.xlu0 %v1095, 80
        %v1788 = vpop.permute.xlu0 %1787
        %1789 = vrot.lane.b32.xlu0 %v1096, 80
        %v1790 = vpop.permute.xlu0 %1789
        %1791 = vrot.lane.b32.xlu0 %v1097, 80
        %v1792 = vpop.permute.xlu0 %1791
        %1793 = vrot.lane.b32.xlu0 %v1098, 80
        %v1794 = vpop.permute.xlu0 %1793
        %1795 = vrot.lane.b32.xlu0 %v1099, 80
        %v1796 = vpop.permute.xlu0 %1795
        %1797 = vrot.lane.b32.xlu0 %v1100, 80
        %v1798 = vpop.permute.xlu0 %1797
        %1799 = vrot.lane.b32.xlu0 %v1101, 80
        %v1800 = vpop.permute.xlu0 %1799
        %1801 = vrot.lane.b32.xlu0 %v1102, 80
        %v1802 = vpop.permute.xlu0 %1801
        %1803 = vrot.lane.b32.xlu0 %v1103, 80
        %v1804 = vpop.permute.xlu0 %1803
        %1805 = vrot.lane.b32.xlu0 %v1104, 80
        %v1806 = vpop.permute.xlu0 %1805
        %1807 = vrot.lane.b32.xlu0 %v1105, 80
        %v1808 = vpop.permute.xlu0 %1807
        %1809 = vrot.lane.b32.xlu0 %v1106, 80
        %v1810 = vpop.permute.xlu0 %1809
        %1811 = vrot.lane.b32.xlu0 %v1107, 80
        %v1812 = vpop.permute.xlu0 %1811
        %1877 = vrot.lane.b32.xlu0 %v1109, 96
        %v1878 = vpop.permute.xlu0 %1877
        %1879 = vrot.lane.b32.xlu0 %v1110, 96
        %v1880 = vpop.permute.xlu0 %1879
        %1881 = vrot.lane.b32.xlu0 %v1111, 96
        %v1882 = vpop.permute.xlu0 %1881
        %1883 = vrot.lane.b32.xlu0 %v1112, 96
        %v1884 = vpop.permute.xlu0 %1883
        %1885 = vrot.lane.b32.xlu0 %v1113, 96
        %v1886 = vpop.permute.xlu0 %1885
        %1887 = vrot.lane.b32.xlu0 %v1114, 96
        %v1888 = vpop.permute.xlu0 %1887
        %1889 = vrot.lane.b32.xlu0 %v1115, 96
        %v1890 = vpop.permute.xlu0 %1889
        %1891 = vrot.lane.b32.xlu0 %v1116, 96
        %v1892 = vpop.permute.xlu0 %1891
        %1893 = vrot.lane.b32.xlu0 %v1117, 96
        %v1894 = vpop.permute.xlu0 %1893
        %1895 = vrot.lane.b32.xlu0 %v1118, 96
        %v1896 = vpop.permute.xlu0 %1895
        %1897 = vrot.lane.b32.xlu0 %v1119, 96
        %v1898 = vpop.permute.xlu0 %1897
        %1899 = vrot.lane.b32.xlu0 %v1120, 96
        %v1900 = vpop.permute.xlu0 %1899
        %1901 = vrot.lane.b32.xlu0 %v1121, 96
        %v1902 = vpop.permute.xlu0 %1901
        %1903 = vrot.lane.b32.xlu0 %v1122, 96
        %v1904 = vpop.permute.xlu0 %1903
        %1905 = vrot.lane.b32.xlu0 %v1123, 96
        %v1906 = vpop.permute.xlu0 %1905
        %1907 = vrot.lane.b32.xlu0 %v1124, 96
        %v1908 = vpop.permute.xlu0 %1907
        %1909 = vrot.lane.b32.xlu0 %v1125, 96
        %v1910 = vpop.permute.xlu0 %1909
        %1911 = vrot.lane.b32.xlu0 %v1126, 96
        %v1912 = vpop.permute.xlu0 %1911
        %1913 = vrot.lane.b32.xlu0 %v1127, 96
        %v1914 = vpop.permute.xlu0 %1913
        %1915 = vrot.lane.b32.xlu0 %v1128, 96
        %v1916 = vpop.permute.xlu0 %1915
        %1917 = vrot.lane.b32.xlu0 %v1129, 96
        %v1918 = vpop.permute.xlu0 %1917
        %1919 = vrot.lane.b32.xlu0 %v1130, 96
        %v1920 = vpop.permute.xlu0 %1919
        %1921 = vrot.lane.b32.xlu0 %v1131, 96
        %v1922 = vpop.permute.xlu0 %1921
        %1923 = vrot.lane.b32.xlu0 %v1132, 96
        %v1924 = vpop.permute.xlu0 %1923
        %1925 = vrot.lane.b32.xlu0 %v1133, 96
        %v1926 = vpop.permute.xlu0 %1925
        %1927 = vrot.lane.b32.xlu0 %v1134, 96
        %v1928 = vpop.permute.xlu0 %1927
        %1929 = vrot.lane.b32.xlu0 %v1135, 96
        %v1930 = vpop.permute.xlu0 %1929
        %1931 = vrot.lane.b32.xlu0 %v1136, 96
        %v1932 = vpop.permute.xlu0 %1931
        %1933 = vrot.lane.b32.xlu0 %v1137, 96
        %v1934 = vpop.permute.xlu0 %1933
        %1935 = vrot.lane.b32.xlu0 %v1138, 96
        %v1936 = vpop.permute.xlu0 %1935
        %1937 = vrot.lane.b32.xlu0 %v1139, 96
        %v1938 = vpop.permute.xlu0 %1937
        %1939 = vrot.lane.b32.xlu0 %v1140, 96
        %v1940 = vpop.permute.xlu0 %1939
        %2005 = vrot.lane.b32.xlu0 %v1141, 112
        %v2006 = vpop.permute.xlu0 %2005
        %2007 = vrot.lane.b32.xlu0 %v1142, 112
        %v2008 = vpop.permute.xlu0 %2007
        %2009 = vrot.lane.b32.xlu0 %v1143, 112
        %v2010 = vpop.permute.xlu0 %2009
        %2011 = vrot.lane.b32.xlu0 %v1144, 112
        %v2012 = vpop.permute.xlu0 %2011
        %2013 = vrot.lane.b32.xlu0 %v1145, 112
        %v2014 = vpop.permute.xlu0 %2013
        %2015 = vrot.lane.b32.xlu0 %v1146, 112
        %v2016 = vpop.permute.xlu0 %2015
        %2017 = vrot.lane.b32.xlu0 %v1147, 112
        %v2018 = vpop.permute.xlu0 %2017
        %2019 = vrot.lane.b32.xlu0 %v1148, 112
        %v2020 = vpop.permute.xlu0 %2019
        %2021 = vrot.lane.b32.xlu0 %v1149, 112
        %v2022 = vpop.permute.xlu0 %2021
        %2023 = vrot.lane.b32.xlu0 %v1150, 112
        %v2024 = vpop.permute.xlu0 %2023
        %2025 = vrot.lane.b32.xlu0 %v1151, 112
        %v2026 = vpop.permute.xlu0 %2025
        %2027 = vrot.lane.b32.xlu0 %v1152, 112
        %v2028 = vpop.permute.xlu0 %2027
        %2029 = vrot.lane.b32.xlu0 %v1153, 112
        %v2030 = vpop.permute.xlu0 %2029
        %2031 = vrot.lane.b32.xlu0 %v1154, 112
        %v2032 = vpop.permute.xlu0 %2031
        %2033 = vrot.lane.b32.xlu0 %v1155, 112
        %v2034 = vpop.permute.xlu0 %2033
        %2035 = vrot.lane.b32.xlu0 %v1156, 112
        %v2036 = vpop.permute.xlu0 %2035
        %2037 = vrot.lane.b32.xlu0 %v1157, 112
        %v2038 = vpop.permute.xlu0 %2037
        %2039 = vrot.lane.b32.xlu0 %v1158, 112
        %v2040 = vpop.permute.xlu0 %2039
        %2041 = vrot.lane.b32.xlu0 %v1159, 112
        %v2042 = vpop.permute.xlu0 %2041
        %2043 = vrot.lane.b32.xlu0 %v1160, 112
        %v2044 = vpop.permute.xlu0 %2043
        %2045 = vrot.lane.b32.xlu0 %v1161, 112
        %v2046 = vpop.permute.xlu0 %2045
        %2047 = vrot.lane.b32.xlu0 %v1162, 112
        %v2048 = vpop.permute.xlu0 %2047
        %2049 = vrot.lane.b32.xlu0 %v1163, 112
        %v2050 = vpop.permute.xlu0 %2049
        %2051 = vrot.lane.b32.xlu0 %v1164, 112
        %v2052 = vpop.permute.xlu0 %2051
        %2053 = vrot.lane.b32.xlu0 %v1165, 112
        %v2054 = vpop.permute.xlu0 %2053
        %2055 = vrot.lane.b32.xlu0 %v1166, 112
        %v2056 = vpop.permute.xlu0 %2055
        %2057 = vrot.lane.b32.xlu0 %v1167, 112
        %v2058 = vpop.permute.xlu0 %2057
        %2059 = vrot.lane.b32.xlu0 %v1168, 112
        %v2060 = vpop.permute.xlu0 %2059
        %2061 = vrot.lane.b32.xlu0 %v1169, 112
        %v2062 = vpop.permute.xlu0 %2061
        %2063 = vrot.lane.b32.xlu0 %v1170, 112
        %v2064 = vpop.permute.xlu0 %2063
        %2065 = vrot.lane.b32.xlu0 %v1171, 112
        %v2066 = vpop.permute.xlu0 %2065
        %2067 = vrot.lane.b32.xlu0 %v1172, 112
        %v2068 = vpop.permute.xlu0 %2067
        %v2101 = vsel %vm765, %v916, %v1238
        %v2102 = vsel %vm765, %v917, %v1240
        %v2103 = vsel %vm765, %v918, %v1242
        %v2104 = vsel %vm765, %v919, %v1244
        %v2105 = vsel %vm765, %v920, %v1246
        %v2106 = vsel %vm765, %v921, %v1248
        %v2107 = vsel %vm765, %v922, %v1250
        %v2108 = vsel %vm765, %v923, %v1252
        %v2109 = vsel %vm765, %v924, %v1254
        %v2110 = vsel %vm765, %v925, %v1256
        %v2111 = vsel %vm765, %v926, %v1258
        %v2112 = vsel %vm765, %v927, %v1260
        %v2113 = vsel %vm765, %v928, %v1262
        %v2114 = vsel %vm765, %v929, %v1264
        %v2115 = vsel %vm765, %v930, %v1266
        %v2116 = vsel %vm765, %v931, %v1268
        %v2117 = vsel %vm765, %v932, %v1270
        %v2118 = vsel %vm765, %v933, %v1272
        %v2119 = vsel %vm765, %v934, %v1274
        %v2120 = vsel %vm765, %v935, %v1276
        %v2121 = vsel %vm765, %v936, %v1278
        %v2122 = vsel %vm765, %v937, %v1280
        %v2123 = vsel %vm765, %v938, %v1282
        %v2124 = vsel %vm765, %v939, %v1284
        %v2125 = vsel %vm765, %v940, %v1286
        %v2126 = vsel %vm765, %v941, %v1288
        %v2127 = vsel %vm765, %v942, %v1290
        %v2128 = vsel %vm765, %v943, %v1292
        %v2129 = vsel %vm765, %v944, %v1294
        %v2130 = vsel %vm765, %v945, %v1296
        %v2131 = vsel %vm765, %v946, %v1298
        %v2132 = vsel %vm765, %v947, %v1300
        %v2133 = vsel %vm522, %v2101, %v1366
        %v2134 = vsel %vm522, %v2102, %v1368
        %v2135 = vsel %vm522, %v2103, %v1370
        %v2136 = vsel %vm522, %v2104, %v1372
        %v2137 = vsel %vm522, %v2105, %v1374
        %v2138 = vsel %vm522, %v2106, %v1376
        %v2139 = vsel %vm522, %v2107, %v1378
        %v2140 = vsel %vm522, %v2108, %v1380
        %v2141 = vsel %vm522, %v2109, %v1382
        %v2142 = vsel %vm522, %v2110, %v1384
        %v2143 = vsel %vm522, %v2111, %v1386
        %v2144 = vsel %vm522, %v2112, %v1388
        %v2145 = vsel %vm522, %v2113, %v1390
        %v2146 = vsel %vm522, %v2114, %v1392
        %v2147 = vsel %vm522, %v2115, %v1394
        %v2148 = vsel %vm522, %v2116, %v1396
        %v2149 = vsel %vm522, %v2117, %v1398
        %v2150 = vsel %vm522, %v2118, %v1400
        %v2151 = vsel %vm522, %v2119, %v1402
        %v2152 = vsel %vm522, %v2120, %v1404
        %v2153 = vsel %vm522, %v2121, %v1406
        %v2154 = vsel %vm522, %v2122, %v1408
        %v2155 = vsel %vm522, %v2123, %v1410
        %v2156 = vsel %vm522, %v2124, %v1412
        %v2157 = vsel %vm522, %v2125, %v1414
        %v2158 = vsel %vm522, %v2126, %v1416
        %v2159 = vsel %vm522, %v2127, %v1418
        %v2160 = vsel %vm522, %v2128, %v1420
        %v2161 = vsel %vm522, %v2129, %v1422
        %v2162 = vsel %vm522, %v2130, %v1424
        %v2163 = vsel %vm522, %v2131, %v1426
        %v2164 = vsel %vm522, %v2132, %v1428
        %vm2165 = vcmask 392192
        %v2166 = vsel %vm2165, %v2133, %v1494
        %v2167 = vsel %vm2165, %v2134, %v1496
        %v2168 = vsel %vm2165, %v2135, %v1498
        %v2169 = vsel %vm2165, %v2136, %v1500
        %v2170 = vsel %vm2165, %v2137, %v1502
        %v2171 = vsel %vm2165, %v2138, %v1504
        %v2172 = vsel %vm2165, %v2139, %v1506
        %v2173 = vsel %vm2165, %v2140, %v1508
        %v2174 = vsel %vm2165, %v2141, %v1510
        %v2175 = vsel %vm2165, %v2142, %v1512
        %v2176 = vsel %vm2165, %v2143, %v1514
        %v2177 = vsel %vm2165, %v2144, %v1516
        %v2178 = vsel %vm2165, %v2145, %v1518
        %v2179 = vsel %vm2165, %v2146, %v1520
        %v2180 = vsel %vm2165, %v2147, %v1522
        %v2181 = vsel %vm2165, %v2148, %v1524
        %v2182 = vsel %vm2165, %v2149, %v1526
        %v2183 = vsel %vm2165, %v2150, %v1528
        %v2184 = vsel %vm2165, %v2151, %v1530
        %v2185 = vsel %vm2165, %v2152, %v1532
        %v2186 = vsel %vm2165, %v2153, %v1534
        %v2187 = vsel %vm2165, %v2154, %v1536
        %v2188 = vsel %vm2165, %v2155, %v1538
        %v2189 = vsel %vm2165, %v2156, %v1540
        %v2190 = vsel %vm2165, %v2157, %v1542
        %v2191 = vsel %vm2165, %v2158, %v1544
        %v2192 = vsel %vm2165, %v2159, %v1546
        %v2193 = vsel %vm2165, %v2160, %v1548
        %v2194 = vsel %vm2165, %v2161, %v1550
        %v2195 = vsel %vm2165, %v2162, %v1552
        %v2196 = vsel %vm2165, %v2163, %v1554
        %v2197 = vsel %vm2165, %v2164, %v1556
        %vm2198 = vcmask 523264
        %v2199 = vsel %vm2198, %v2166, %v1622
        %v2200 = vsel %vm2198, %v2167, %v1624
        %v2201 = vsel %vm2198, %v2168, %v1626
        %v2202 = vsel %vm2198, %v2169, %v1628
        %v2203 = vsel %vm2198, %v2170, %v1630
        %v2204 = vsel %vm2198, %v2171, %v1632
        %v2205 = vsel %vm2198, %v2172, %v1634
        %v2206 = vsel %vm2198, %v2173, %v1636
        %v2207 = vsel %vm2198, %v2174, %v1638
        %v2208 = vsel %vm2198, %v2175, %v1640
        %v2209 = vsel %vm2198, %v2176, %v1642
        %v2210 = vsel %vm2198, %v2177, %v1644
        %v2211 = vsel %vm2198, %v2178, %v1646
        %v2212 = vsel %vm2198, %v2179, %v1648
        %v2213 = vsel %vm2198, %v2180, %v1650
        %v2214 = vsel %vm2198, %v2181, %v1652
        %v2215 = vsel %vm2198, %v2182, %v1654
        %v2216 = vsel %vm2198, %v2183, %v1656
        %v2217 = vsel %vm2198, %v2184, %v1658
        %v2218 = vsel %vm2198, %v2185, %v1660
        %v2219 = vsel %vm2198, %v2186, %v1662
        %v2220 = vsel %vm2198, %v2187, %v1664
        %v2221 = vsel %vm2198, %v2188, %v1666
        %v2222 = vsel %vm2198, %v2189, %v1668
        %v2223 = vsel %vm2198, %v2190, %v1670
        %v2224 = vsel %vm2198, %v2191, %v1672
        %v2225 = vsel %vm2198, %v2192, %v1674
        %v2226 = vsel %vm2198, %v2193, %v1676
        %v2227 = vsel %vm2198, %v2194, %v1678
        %v2228 = vsel %vm2198, %v2195, %v1680
        %v2229 = vsel %vm2198, %v2196, %v1682
        %v2230 = vsel %vm2198, %v2197, %v1684
        %vm2231 = vcmask 654336
        %v2232 = vsel %vm2231, %v2199, %v1750
        %v2233 = vsel %vm2231, %v2200, %v1752
        %v2234 = vsel %vm2231, %v2201, %v1754
        %v2235 = vsel %vm2231, %v2202, %v1756
        %v2236 = vsel %vm2231, %v2203, %v1758
        %v2237 = vsel %vm2231, %v2204, %v1760
        %v2238 = vsel %vm2231, %v2205, %v1762
        %v2239 = vsel %vm2231, %v2206, %v1764
        %v2240 = vsel %vm2231, %v2207, %v1766
        %v2241 = vsel %vm2231, %v2208, %v1768
        %v2242 = vsel %vm2231, %v2209, %v1770
        %v2243 = vsel %vm2231, %v2210, %v1772
        %v2244 = vsel %vm2231, %v2211, %v1774
        %v2245 = vsel %vm2231, %v2212, %v1776
        %v2246 = vsel %vm2231, %v2213, %v1778
        %v2247 = vsel %vm2231, %v2214, %v1780
        %v2248 = vsel %vm2231, %v2215, %v1782
        %v2249 = vsel %vm2231, %v2216, %v1784
        %v2250 = vsel %vm2231, %v2217, %v1786
        %v2251 = vsel %vm2231, %v2218, %v1788
        %v2252 = vsel %vm2231, %v2219, %v1790
        %v2253 = vsel %vm2231, %v2220, %v1792
        %v2254 = vsel %vm2231, %v2221, %v1794
        %v2255 = vsel %vm2231, %v2222, %v1796
        %v2256 = vsel %vm2231, %v2223, %v1798
        %v2257 = vsel %vm2231, %v2224, %v1800
        %v2258 = vsel %vm2231, %v2225, %v1802
        %v2259 = vsel %vm2231, %v2226, %v1804
        %v2260 = vsel %vm2231, %v2227, %v1806
        %v2261 = vsel %vm2231, %v2228, %v1808
        %v2262 = vsel %vm2231, %v2229, %v1810
        %v2263 = vsel %vm2231, %v2230, %v1812
        %vm2264 = vcmask 785408
        %v2265 = vsel %vm2264, %v2232, %v1878
        %v2266 = vsel %vm2264, %v2233, %v1880
        %v2267 = vsel %vm2264, %v2234, %v1882
        %v2268 = vsel %vm2264, %v2235, %v1884
        %v2269 = vsel %vm2264, %v2236, %v1886
        %v2270 = vsel %vm2264, %v2237, %v1888
        %v2271 = vsel %vm2264, %v2238, %v1890
        %v2272 = vsel %vm2264, %v2239, %v1892
        %v2273 = vsel %vm2264, %v2240, %v1894
        %v2274 = vsel %vm2264, %v2241, %v1896
        %v2275 = vsel %vm2264, %v2242, %v1898
        %v2276 = vsel %vm2264, %v2243, %v1900
        %v2277 = vsel %vm2264, %v2244, %v1902
        %v2278 = vsel %vm2264, %v2245, %v1904
        %v2279 = vsel %vm2264, %v2246, %v1906
        %v2280 = vsel %vm2264, %v2247, %v1908
        %v2281 = vsel %vm2264, %v2248, %v1910
        %v2282 = vsel %vm2264, %v2249, %v1912
        %v2283 = vsel %vm2264, %v2250, %v1914
        %v2284 = vsel %vm2264, %v2251, %v1916
        %v2285 = vsel %vm2264, %v2252, %v1918
        %v2286 = vsel %vm2264, %v2253, %v1920
        %v2287 = vsel %vm2264, %v2254, %v1922
        %v2288 = vsel %vm2264, %v2255, %v1924
        %v2289 = vsel %vm2264, %v2256, %v1926
        %v2290 = vsel %vm2264, %v2257, %v1928
        %v2291 = vsel %vm2264, %v2258, %v1930
        %v2292 = vsel %vm2264, %v2259, %v1932
        %v2293 = vsel %vm2264, %v2260, %v1934
        %v2294 = vsel %vm2264, %v2261, %v1936
        %v2295 = vsel %vm2264, %v2262, %v1938
        %v2296 = vsel %vm2264, %v2263, %v1940
        %vm2297 = vcmask 916480
        %v2298 = vsel %vm2297, %v2265, %v2006
        %v2299 = vsel %vm2297, %v2266, %v2008
        %v2300 = vsel %vm2297, %v2267, %v2010
        %v2301 = vsel %vm2297, %v2268, %v2012
        %v2302 = vsel %vm2297, %v2269, %v2014
        %v2303 = vsel %vm2297, %v2270, %v2016
        %v2304 = vsel %vm2297, %v2271, %v2018
        %v2305 = vsel %vm2297, %v2272, %v2020
        %v2306 = vsel %vm2297, %v2273, %v2022
        %v2307 = vsel %vm2297, %v2274, %v2024
        %v2308 = vsel %vm2297, %v2275, %v2026
        %v2309 = vsel %vm2297, %v2276, %v2028
        %v2310 = vsel %vm2297, %v2277, %v2030
        %v2311 = vsel %vm2297, %v2278, %v2032
        %v2312 = vsel %vm2297, %v2279, %v2034
        %v2313 = vsel %vm2297, %v2280, %v2036
        %v2314 = vsel %vm2297, %v2281, %v2038
        %v2315 = vsel %vm2297, %v2282, %v2040
        %v2316 = vsel %vm2297, %v2283, %v2042
        %v2317 = vsel %vm2297, %v2284, %v2044
        %v2318 = vsel %vm2297, %v2285, %v2046
        %v2319 = vsel %vm2297, %v2286, %v2048
        %v2320 = vsel %vm2297, %v2287, %v2050
        %v2321 = vsel %vm2297, %v2288, %v2052
        %v2322 = vsel %vm2297, %v2289, %v2054
        %v2323 = vsel %vm2297, %v2290, %v2056
        %v2324 = vsel %vm2297, %v2291, %v2058
        %v2325 = vsel %vm2297, %v2292, %v2060
        %v2326 = vsel %vm2297, %v2293, %v2062
        %v2327 = vsel %vm2297, %v2294, %v2064
        %v2328 = vsel %vm2297, %v2295, %v2066
        %v2329 = vsel %vm2297, %v2296, %v2068
        %v2330 = vpack.c.bf16 %v2299, %v2298
        %v2331 = vpack.c.bf16 %v1174, %v1173
        %v2332 = vpack.c.bf16 %v2301, %v2300
        %v2333 = vpack.c.bf16 %v1176, %v1175
        %v2334 = vpack.c.bf16 %v2303, %v2302
        %v2335 = vpack.c.bf16 %v1178, %v1177
        %v2336 = vpack.c.bf16 %v2305, %v2304
        %v2337 = vpack.c.bf16 %v1180, %v1179
        %v2338 = vpack.c.bf16 %v2307, %v2306
        %v2339 = vpack.c.bf16 %v1182, %v1181
        %v2340 = vpack.c.bf16 %v2309, %v2308
        %v2341 = vpack.c.bf16 %v1184, %v1183
        %v2342 = vpack.c.bf16 %v2311, %v2310
        %v2343 = vpack.c.bf16 %v1186, %v1185
        %v2344 = vpack.c.bf16 %v2313, %v2312
        %v2345 = vpack.c.bf16 %v1188, %v1187
        %v2346 = vpack.c.bf16 %v2315, %v2314
        %v2347 = vpack.c.bf16 %v1190, %v1189
        %v2348 = vpack.c.bf16 %v2317, %v2316
        %v2349 = vpack.c.bf16 %v1192, %v1191
        %v2350 = vpack.c.bf16 %v2319, %v2318
        %v2351 = vpack.c.bf16 %v1194, %v1193
        %v2352 = vpack.c.bf16 %v2321, %v2320
        %v2353 = vpack.c.bf16 %v1196, %v1195
        %v2354 = vpack.c.bf16 %v2323, %v2322
        %v2355 = vpack.c.bf16 %v1198, %v1197
        %v2356 = vpack.c.bf16 %v2325, %v2324
        %v2357 = vpack.c.bf16 %v1200, %v1199
        %v2358 = vpack.c.bf16 %v2327, %v2326
        %v2359 = vpack.c.bf16 %v1202, %v1201
        %v2360 = vpack.c.bf16 %v2329, %v2328
        %v2361 = vpack.c.bf16 %v1204, %v1203
        %v2362 = vld [vmem:[#allocation9] sm:$0xf]
        %v2363 = vld [vmem:[#allocation9 + $0x4] sm:$0xf]
        %v2364 = vld [vmem:[#allocation9 + $0x8] sm:$0xf]
        %v2365 = vld [vmem:[#allocation9 + $0xc] sm:$0xf]
        %v2366 = vld [vmem:[#allocation9 + $0x10] sm:$0xf]
        %v2367 = vld [vmem:[#allocation9 + $0x14] sm:$0xf]
        %v2368 = vld [vmem:[#allocation9 + $0x18] sm:$0xf]
        %v2369 = vld [vmem:[#allocation9 + $0x1c] sm:$0xf]
        %v2370 = vld [vmem:[#allocation9 + $0x20] sm:$0xf]
        %v2371 = vld [vmem:[#allocation9 + $0x24] sm:$0xf]
        %v2372 = vld [vmem:[#allocation9 + $0x28] sm:$0xf]
        %v2373 = vld [vmem:[#allocation9 + $0x2c] sm:$0xf]
        %v2374 = vld [vmem:[#allocation9 + $0x30] sm:$0xf]
        %v2375 = vld [vmem:[#allocation9 + $0x34] sm:$0xf]
        %v2376 = vld [vmem:[#allocation9 + $0x38] sm:$0xf]
        %v2377 = vld [vmem:[#allocation9 + $0x3c] sm:$0xf]
        %v2378 = vld [vmem:[#allocation9 + $0x40] sm:$0xf]
        %v2379 = vld [vmem:[#allocation9 + $0x44] sm:$0xf]
        %v2380 = vld [vmem:[%s6] sm:$0x1]
        %v2382 = vlaneseq
        %v2383 = vshrl.u32 %v2382, 7
        %v2384 = vsub.s32 0, %v2383
        %v2385 = vrot.slane %v2380, %v2384
        %v2405 = vunpack.c.l.b16 %v2362
        %v2406 = vunpack.c.l.b16 %v2363
        %v2407 = vunpack.c.l.b16 %v2364
        %v2408 = vunpack.c.l.b16 %v2365
        %v2409 = vunpack.c.l.b16 %v2366
        %v2410 = vunpack.c.l.b16 %v2367
        %v2411 = vunpack.c.l.b16 %v2368
        %v2412 = vunpack.c.l.b16 %v2369
        %v2413 = vunpack.c.l.b16 %v2370
        %v2414 = vunpack.c.l.b16 %v2371
        %v2415 = vunpack.c.l.b16 %v2372
        %v2416 = vunpack.c.l.b16 %v2373
        %v2417 = vunpack.c.l.b16 %v2374
        %v2418 = vunpack.c.l.b16 %v2375
        %v2419 = vunpack.c.l.b16 %v2376
        %v2420 = vunpack.c.l.b16 %v2377
        %v2421 = vunpack.c.l.b16 %v2378
        %v2422 = vunpack.c.l.b16 %v2379
        %v2423 = vpack.c.b16 %v2406, %v2405
        %v2424 = vpack.c.b16 %v2408, %v2407
        %v2425 = vpack.c.b16 %v2410, %v2409
        %v2426 = vpack.c.b16 %v2412, %v2411
        %v2427 = vpack.c.b16 %v2414, %v2413
        %v2428 = vpack.c.b16 %v2416, %v2415
        %v2429 = vpack.c.b16 %v2418, %v2417
        %v2430 = vpack.c.b16 %v2420, %v2419
        %v2431 = vpack.c.b16 %v2422, %v2421
        %v2442 = vsel %vm765, %v2331, 0
        %v2445 = vsel %vm765, %v2333, 0
        %v2448 = vsel %vm765, %v2335, 0
        %v2451 = vsel %vm765, %v2337, 0
        %v2454 = vsel %vm765, %v2339, 0
        %v2457 = vsel %vm765, %v2341, 0
        %v2460 = vsel %vm765, %v2343, 0
        %v2463 = vsel %vm765, %v2345, 0
        %v2466 = vsel %vm765, %v2347, 0
        %v2469 = vsel %vm765, %v2349, 0
        %v2472 = vsel %vm765, %v2351, 0
        %v2475 = vsel %vm765, %v2353, 0
        %v2478 = vsel %vm765, %v2355, 0
        %v2481 = vsel %vm765, %v2357, 0
        %v2484 = vsel %vm765, %v2359, 0
        %v2487 = vsel %vm765, %v2361, 0
        %2489 = vmatprep.subr.bf16.mxu0 0
        %2490 = vmatpush1.bf16.msra.mxu0 %v2423
        %2491 = vmatprep.subr.bf16.mxu0 0
        %2492 = vmatpush1.bf16.msra.mxu0 %v2424
        %2493 = vmatprep.subr.bf16.mxu0 0
        %2494 = vmatpush1.bf16.msra.mxu0 %v2425
        %2495 = vmatprep.subr.bf16.mxu0 0
        %2496 = vmatpush1.bf16.msra.mxu0 %v2426
        %2497 = vmatprep.subr.bf16.mxu0 0
        %2498 = vmatpush1.bf16.msra.mxu0 %v2427
        %2499 = vmatprep.subr.bf16.mxu0 0
        %2500 = vmatpush1.bf16.msra.mxu0 %v2428
        %2501 = vmatprep.subr.bf16.mxu0 0
        %2502 = vmatpush1.bf16.msra.mxu0 %v2429
        %2503 = vmatprep.subr.bf16.mxu0 0
        %2504 = vmatpush1.bf16.msra.mxu0 %v2430
        %2505 = vmatprep.subr.bf16.mxu0 0
        %2506 = vmatpush1.bf16.msra.mxu0 %v2431
        %2507 = vmatprep.subr.bf16.mxu0 0
        %2508 = vmatpush1.bf16.msra.mxu0 0
        %2509 = vmatprep.subr.bf16.mxu0 0
        %2510 = vmatpush1.bf16.msra.mxu0 0
        %2511 = vmatprep.subr.bf16.mxu0 0
        %2512 = vmatpush1.bf16.msra.mxu0 0
        %2513 = vmatprep.subr.bf16.mxu0 0
        %2514 = vmatpush1.bf16.msra.mxu0 0
        %2515 = vmatprep.subr.bf16.mxu0 0
        %2516 = vmatpush1.bf16.msra.mxu0 0
        %2517 = vmatprep.subr.bf16.mxu0 0
        %2518 = vmatpush1.bf16.msra.mxu0 0
        %2519 = vmatprep.subr.bf16.mxu0 0
        %2520 = vmatpush1.bf16.msra.mxu0 0
        %2521 = vmatprep.mubr.bf16.mxu0 %v2442
        %2522 = vmatmul.mubr.bf16.gmra.mrb[0].mxu0 %v2330
        %v2523 = vpop.f32.mrb[0].mxu0
        %v2524 = vadd.f32 %v2385, %v2523
        %v2525 = vpop.f32.mrb[0].mxu0
        %v2526 = vpop.f32.mrb[0].mxu0
        %v2527 = vadd.f32 %v2385, %v2526
        %v2528 = vpop.f32.mrb[0].mxu0
        %2529 = vmatprep.mubr.bf16.mxu0 %v2445
        %2530 = vmatmul.mubr.bf16.gmra.mrb[0].mxu0 %v2332
        %v2531 = vpop.f32.mrb[0].mxu0
        %v2532 = vadd.f32 %v2385, %v2531
        %v2533 = vpop.f32.mrb[0].mxu0
        %v2534 = vpop.f32.mrb[0].mxu0
        %v2535 = vadd.f32 %v2385, %v2534
        %v2536 = vpop.f32.mrb[0].mxu0
        %2537 = vmatprep.mubr.bf16.mxu0 %v2448
        %2538 = vmatmul.mubr.bf16.gmra.mrb[0].mxu0 %v2334
        %v2539 = vpop.f32.mrb[0].mxu0
        %v2540 = vadd.f32 %v2385, %v2539
        %v2541 = vpop.f32.mrb[0].mxu0
        %v2542 = vpop.f32.mrb[0].mxu0
        %v2543 = vadd.f32 %v2385, %v2542
        %v2544 = vpop.f32.mrb[0].mxu0
        %2545 = vmatprep.mubr.bf16.mxu0 %v2451
        %2546 = vmatmul.mubr.bf16.gmra.mrb[0].mxu0 %v2336
        %v2547 = vpop.f32.mrb[0].mxu0
        %v2548 = vadd.f32 %v2385, %v2547
        %v2549 = vpop.f32.mrb[0].mxu0
        %v2550 = vpop.f32.mrb[0].mxu0
        %v2551 = vadd.f32 %v2385, %v2550
        %v2552 = vpop.f32.mrb[0].mxu0
        %2553 = vmatprep.mubr.bf16.mxu0 %v2454
        %2554 = vmatmul.mubr.bf16.gmra.mrb[0].mxu0 %v2338
        %v2555 = vpop.f32.mrb[0].mxu0
        %v2556 = vadd.f32 %v2385, %v2555
        %v2557 = vpop.f32.mrb[0].mxu0
        %v2558 = vpop.f32.mrb[0].mxu0
        %v2559 = vadd.f32 %v2385, %v2558
        %v2560 = vpop.f32.mrb[0].mxu0
        %2561 = vmatprep.mubr.bf16.mxu0 %v2457
        %2562 = vmatmul.mubr.bf16.gmra.mrb[0].mxu0 %v2340
        %v2563 = vpop.f32.mrb[0].mxu0
        %v2564 = vadd.f32 %v2385, %v2563
        %v2565 = vpop.f32.mrb[0].mxu0
        %v2566 = vpop.f32.mrb[0].mxu0
        %v2567 = vadd.f32 %v2385, %v2566
        %v2568 = vpop.f32.mrb[0].mxu0
        %2569 = vmatprep.mubr.bf16.mxu0 %v2460
        %2570 = vmatmul.mubr.bf16.gmra.mrb[0].mxu0 %v2342
        %v2571 = vpop.f32.mrb[0].mxu0
        %v2572 = vadd.f32 %v2385, %v2571
        %v2573 = vpop.f32.mrb[0].mxu0
        %v2574 = vpop.f32.mrb[0].mxu0
        %v2575 = vadd.f32 %v2385, %v2574
        %v2576 = vpop.f32.mrb[0].mxu0
        %2577 = vmatprep.mubr.bf16.mxu0 %v2463
        %2578 = vmatmul.mubr.bf16.gmra.mrb[0].mxu0 %v2344
        %v2579 = vpop.f32.mrb[0].mxu0
        %v2580 = vadd.f32 %v2385, %v2579
        %v2581 = vpop.f32.mrb[0].mxu0
        %v2582 = vpop.f32.mrb[0].mxu0
        %v2583 = vadd.f32 %v2385, %v2582
        %v2584 = vpop.f32.mrb[0].mxu0
        %2585 = vmatprep.mubr.bf16.mxu0 %v2466
        %2586 = vmatmul.mubr.bf16.gmra.mrb[0].mxu0 %v2346
        %v2587 = vpop.f32.mrb[0].mxu0
        %v2588 = vadd.f32 %v2385, %v2587
        %v2589 = vpop.f32.mrb[0].mxu0
        %v2590 = vpop.f32.mrb[0].mxu0
        %v2591 = vadd.f32 %v2385, %v2590
        %v2592 = vpop.f32.mrb[0].mxu0
        %2593 = vmatprep.mubr.bf16.mxu0 %v2469
        %2594 = vmatmul.mubr.bf16.gmra.mrb[0].mxu0 %v2348
        %v2595 = vpop.f32.mrb[0].mxu0
        %v2596 = vadd.f32 %v2385, %v2595
        %v2597 = vpop.f32.mrb[0].mxu0
        %v2598 = vpop.f32.mrb[0].mxu0
        %v2599 = vadd.f32 %v2385, %v2598
        %v2600 = vpop.f32.mrb[0].mxu0
        %2601 = vmatprep.mubr.bf16.mxu0 %v2472
        %2602 = vmatmul.mubr.bf16.gmra.mrb[0].mxu0 %v2350
        %v2603 = vpop.f32.mrb[0].mxu0
        %v2604 = vadd.f32 %v2385, %v2603
        %v2605 = vpop.f32.mrb[0].mxu0
        %v2606 = vpop.f32.mrb[0].mxu0
        %v2607 = vadd.f32 %v2385, %v2606
        %v2608 = vpop.f32.mrb[0].mxu0
        %2609 = vmatprep.mubr.bf16.mxu0 %v2475
        %2610 = vmatmul.mubr.bf16.gmra.mrb[0].mxu0 %v2352
        %v2611 = vpop.f32.mrb[0].mxu0
        %v2612 = vadd.f32 %v2385, %v2611
        %v2613 = vpop.f32.mrb[0].mxu0
        %v2614 = vpop.f32.mrb[0].mxu0
        %v2615 = vadd.f32 %v2385, %v2614
        %v2616 = vpop.f32.mrb[0].mxu0
        %2617 = vmatprep.mubr.bf16.mxu0 %v2478
        %2618 = vmatmul.mubr.bf16.gmra.mrb[0].mxu0 %v2354
        %v2619 = vpop.f32.mrb[0].mxu0
        %v2620 = vadd.f32 %v2385, %v2619
        %v2621 = vpop.f32.mrb[0].mxu0
        %v2622 = vpop.f32.mrb[0].mxu0
        %v2623 = vadd.f32 %v2385, %v2622
        %v2624 = vpop.f32.mrb[0].mxu0
        %2625 = vmatprep.mubr.bf16.mxu0 %v2481
        %2626 = vmatmul.mubr.bf16.gmra.mrb[0].mxu0 %v2356
        %v2627 = vpop.f32.mrb[0].mxu0
        %v2628 = vadd.f32 %v2385, %v2627
        %v2629 = vpop.f32.mrb[0].mxu0
        %v2630 = vpop.f32.mrb[0].mxu0
        %v2631 = vadd.f32 %v2385, %v2630
        %v2632 = vpop.f32.mrb[0].mxu0
        %2633 = vmatprep.mubr.bf16.mxu0 %v2484
        %2634 = vmatmul.mubr.bf16.gmra.mrb[0].mxu0 %v2358
        %v2635 = vpop.f32.mrb[0].mxu0
        %v2636 = vadd.f32 %v2385, %v2635
        %v2637 = vpop.f32.mrb[0].mxu0
        %v2638 = vpop.f32.mrb[0].mxu0
        %v2639 = vadd.f32 %v2385, %v2638
        %v2640 = vpop.f32.mrb[0].mxu0
        %2641 = vmatprep.mubr.bf16.mxu0 %v2487
        %2642 = vmatmul.mubr.bf16.gmra.mrb[0].mxu0 %v2360
        %v2643 = vpop.f32.mrb[0].mxu0
        %v2644 = vadd.f32 %v2385, %v2643
        %v2645 = vpop.f32.mrb[0].mxu0
        %v2646 = vpop.f32.mrb[0].mxu0
        %v2647 = vadd.f32 %v2385, %v2646
        %v2648 = vpop.f32.mrb[0].mxu0
        %2649 = vdwg.mxu0
        %v2650 = vmax.f32 %v2524, 0.0
        %v2651 = vmax.f32 %v2527, 0.0
        %v2652 = vmax.f32 %v2532, 0.0
        %v2653 = vmax.f32 %v2535, 0.0
        %v2654 = vmax.f32 %v2540, 0.0
        %v2655 = vmax.f32 %v2543, 0.0
        %v2656 = vmax.f32 %v2548, 0.0
        %v2657 = vmax.f32 %v2551, 0.0
        %v2658 = vmax.f32 %v2556, 0.0
        %v2659 = vmax.f32 %v2559, 0.0
        %v2660 = vmax.f32 %v2564, 0.0
        %v2661 = vmax.f32 %v2567, 0.0
        %v2662 = vmax.f32 %v2572, 0.0
        %v2663 = vmax.f32 %v2575, 0.0
        %v2664 = vmax.f32 %v2580, 0.0
        %v2665 = vmax.f32 %v2583, 0.0
        %v2666 = vmax.f32 %v2588, 0.0
        %v2667 = vmax.f32 %v2591, 0.0
        %v2668 = vmax.f32 %v2596, 0.0
        %v2669 = vmax.f32 %v2599, 0.0
        %v2670 = vmax.f32 %v2604, 0.0
        %v2671 = vmax.f32 %v2607, 0.0
        %v2672 = vmax.f32 %v2612, 0.0
        %v2673 = vmax.f32 %v2615, 0.0
        %v2674 = vmax.f32 %v2620, 0.0
        %v2675 = vmax.f32 %v2623, 0.0
        %v2676 = vmax.f32 %v2628, 0.0
        %v2677 = vmax.f32 %v2631, 0.0
        %v2678 = vmax.f32 %v2636, 0.0
        %v2679 = vmax.f32 %v2639, 0.0
        %v2680 = vmax.f32 %v2644, 0.0
        %v2681 = vmax.f32 %v2647, 0.0
        %v2682 = vpack.c.bf16 %v2651, %v2650
        %v2683 = vpack.c.bf16 %v2653, %v2652
        %v2684 = vpack.c.bf16 %v2655, %v2654
        %v2685 = vpack.c.bf16 %v2657, %v2656
        %v2686 = vpack.c.bf16 %v2659, %v2658
        %v2687 = vpack.c.bf16 %v2661, %v2660
        %v2688 = vpack.c.bf16 %v2663, %v2662
        %v2689 = vpack.c.bf16 %v2665, %v2664
        %v2690 = vpack.c.bf16 %v2667, %v2666
        %v2691 = vpack.c.bf16 %v2669, %v2668
        %v2692 = vpack.c.bf16 %v2671, %v2670
        %v2693 = vpack.c.bf16 %v2673, %v2672
        %v2694 = vpack.c.bf16 %v2675, %v2674
        %v2695 = vpack.c.bf16 %v2677, %v2676
        %v2696 = vpack.c.bf16 %v2679, %v2678
        %v2697 = vpack.c.bf16 %v2681, %v2680
        %v2714 = vunpack.c.l.b16 %v2682
        %v2715 = vunpack.c.h.b16 %v2682
        %v2716 = vunpack.c.l.b16 %v2683
        %v2717 = vunpack.c.h.b16 %v2683
        %v2718 = vunpack.c.l.b16 %v2684
        %v2719 = vunpack.c.h.b16 %v2684
        %v2720 = vunpack.c.l.b16 %v2685
        %v2721 = vunpack.c.h.b16 %v2685
        %v2722 = vunpack.c.l.b16 %v2686
        %v2723 = vunpack.c.h.b16 %v2686
        %v2724 = vunpack.c.l.b16 %v2687
        %v2725 = vunpack.c.h.b16 %v2687
        %v2726 = vunpack.c.l.b16 %v2688
        %v2727 = vunpack.c.h.b16 %v2688
        %v2728 = vunpack.c.l.b16 %v2689
        %v2729 = vunpack.c.h.b16 %v2689
        %v2730 = vunpack.c.l.b16 %v2690
        %v2731 = vunpack.c.h.b16 %v2690
        %v2732 = vunpack.c.l.b16 %v2691
        %v2733 = vunpack.c.h.b16 %v2691
        %v2734 = vunpack.c.l.b16 %v2692
        %v2735 = vunpack.c.h.b16 %v2692
        %v2736 = vunpack.c.l.b16 %v2693
        %v2737 = vunpack.c.h.b16 %v2693
        %v2738 = vunpack.c.l.b16 %v2694
        %v2739 = vunpack.c.h.b16 %v2694
        %v2740 = vunpack.c.l.b16 %v2695
        %v2741 = vunpack.c.h.b16 %v2695
        %v2742 = vunpack.c.l.b16 %v2696
        %v2743 = vunpack.c.h.b16 %v2696
        %v2744 = vunpack.c.l.b16 %v2697
        %v2745 = vunpack.c.h.b16 %v2697
        %v2746 = vpack.c.b16 %v2714, %v2714
        %v2747 = vpack.c.b16 %v2715, %v2715
        %v2748 = vpack.c.b16 %v2716, %v2716
        %v2749 = vpack.c.b16 %v2717, %v2717
        %v2750 = vpack.c.b16 %v2718, %v2718
        %v2751 = vpack.c.b16 %v2719, %v2719
        %v2752 = vpack.c.b16 %v2720, %v2720
        %v2753 = vpack.c.b16 %v2721, %v2721
        %v2754 = vpack.c.b16 %v2722, %v2722
        %v2755 = vpack.c.b16 %v2723, %v2723
        %v2756 = vpack.c.b16 %v2724, %v2724
        %v2757 = vpack.c.b16 %v2725, %v2725
        %v2758 = vpack.c.b16 %v2726, %v2726
        %v2759 = vpack.c.b16 %v2727, %v2727
        %v2760 = vpack.c.b16 %v2728, %v2728
        %v2761 = vpack.c.b16 %v2729, %v2729
        %v2762 = vpack.c.b16 %v2730, %v2730
        %v2763 = vpack.c.b16 %v2731, %v2731
        %v2764 = vpack.c.b16 %v2732, %v2732
        %v2765 = vpack.c.b16 %v2733, %v2733
        %v2766 = vpack.c.b16 %v2734, %v2734
        %v2767 = vpack.c.b16 %v2735, %v2735
        %v2768 = vpack.c.b16 %v2736, %v2736
        %v2769 = vpack.c.b16 %v2737, %v2737
        %v2770 = vpack.c.b16 %v2738, %v2738
        %v2771 = vpack.c.b16 %v2739, %v2739
        %v2772 = vpack.c.b16 %v2740, %v2740
        %v2773 = vpack.c.b16 %v2741, %v2741
        %v2774 = vpack.c.b16 %v2742, %v2742
        %v2775 = vpack.c.b16 %v2743, %v2743
        %v2776 = vpack.c.b16 %v2744, %v2744
        %v2777 = vpack.c.b16 %v2745, %v2745
        %2810 = vst [vmem:[%s439] sm:$0xf] %v2746
        %2811 = vst [vmem:[%s439 + $0x4] sm:$0xf] %v2747
        %2812 = vst [vmem:[%s439 + $0x8] sm:$0xf] %v2748
        %2813 = vst [vmem:[%s439 + $0xc] sm:$0xf] %v2749
        %2814 = vst [vmem:[%s439 + $0x10] sm:$0xf] %v2750
        %2815 = vst [vmem:[%s439 + $0x14] sm:$0xf] %v2751
        %2816 = vst [vmem:[%s439 + $0x18] sm:$0xf] %v2752
        %2817 = vst [vmem:[%s439 + $0x1c] sm:$0xf] %v2753
        %2818 = vst [vmem:[%s439 + $0x20] sm:$0xf] %v2754
        %2819 = vst [vmem:[%s439 + $0x24] sm:$0xf] %v2755
        %2820 = vst [vmem:[%s439 + $0x28] sm:$0xf] %v2756
        %2821 = vst [vmem:[%s439 + $0x2c] sm:$0xf] %v2757
        %2822 = vst [vmem:[%s439 + $0x30] sm:$0xf] %v2758
        %2823 = vst [vmem:[%s439 + $0x34] sm:$0xf] %v2759
        %2824 = vst [vmem:[%s439 + $0x38] sm:$0xf] %v2760
        %2825 = vst [vmem:[%s439 + $0x3c] sm:$0xf] %v2761
        %2826 = vst [vmem:[%s439 + $0x40] sm:$0xf] %v2762
        %2827 = vst [vmem:[%s439 + $0x44] sm:$0xf] %v2763
        %2828 = vst [vmem:[%s439 + $0x48] sm:$0xf] %v2764
        %2829 = vst [vmem:[%s439 + $0x4c] sm:$0xf] %v2765
        %2830 = vst [vmem:[%s439 + $0x50] sm:$0xf] %v2766
        %2831 = vst [vmem:[%s439 + $0x54] sm:$0xf] %v2767
        %2832 = vst [vmem:[%s439 + $0x58] sm:$0xf] %v2768
        %2833 = vst [vmem:[%s439 + $0x5c] sm:$0xf] %v2769
        %2834 = vst [vmem:[%s439 + $0x60] sm:$0xf] %v2770
        %2835 = vst [vmem:[%s439 + $0x64] sm:$0xf] %v2771
        %2836 = vst [vmem:[%s439 + $0x68] sm:$0xf] %v2772
        %2837 = vst [vmem:[%s439 + $0x6c] sm:$0xf] %v2773
        %2838 = vst [vmem:[%s439 + $0x70] sm:$0xf] %v2774
        %2839 = vst [vmem:[%s439 + $0x74] sm:$0xf] %v2775
        %2840 = vst [vmem:[%s439 + $0x78] sm:$0xf] %v2776
        %2841 = vst [vmem:[%s439 + $0x7c] sm:$0xf] %v2777
        %s2842 = sand.u32 %s234, 1
        %s2843 = scalar_lea.sflag [#allocation5], %s2842
        %s2844 = sand.u32 %s234, 1
        %s2845 = smul.addr %s2844, 128
        %s2846 = scalar_lea.vmem [#allocation11], %s2845
        // Predicated region
        $region69: #{fire_forward.1} parent=47 // pred_check
          %p2847 = pneg %p244
        $region70: #{fire_forward.1} parent=47 // pred_check_branch
          %2849 = sbr.rel (%p2847) target = $region72
        $region71: #{fire_forward.1} parent=47 // pred_region
          %s2850 = smul.u32 16, %s33
          %s2852 = ssub.s32 2048, 2048
          %2853 = vsyncadd %s2843, %s2852
          %s2854 = smul.addr %s2850, 2
          %s2855 = smul.addr %s32, 32
          %s2856 = sadd.s32 %s2854, %s2855
          %s2857 = smul.addr %s2856, 64
          %s2858 = scalar_lea.hbm %s7, %s2857
          %s2859 = sshll.u32 %s2846, 4
          %s2860 = int_to_ptr.vmem [resolvable:$true] %s2859
          %2865 = dma.vmem_to_hbm [thread:$0]  %s2860, 2048, %s2858, %s2843, 64, 64, 4
        $region72: #{fire_forward.1} parent=47 // pred_fallthru
          _
      $region48: #{fire_forward.1} parent=5 // pred_fallthru
        _
      %p2866 = scmp.le.s32.totalorder 2, %s23
      // Predicated region
      $region73: #{fire_forward.1} parent=5 // pred_check
        %p2867 = pneg %p2866
      $region74: #{fire_forward.1} parent=5 // pred_check_branch
        %2869 = sbr.rel (%p2867) target = $region76
      $region75: #{fire_forward.1} parent=5 // pred_region
        %s2870 = ssub.s32 %s23, 2
        // Predicated region
        $region77: #{fire_forward.1} parent=75 // pred_check
          %p2871 = pneg %p250
        $region78: #{fire_forward.1} parent=75 // pred_check_branch
          %2873 = sbr.rel (%p2871) target = $region80
        $region79: #{fire_forward.1} parent=75 // pred_region
          %s2874 = sand.u32 %s235, 1
          %s2875 = scalar_lea.sflag [#allocation5], %s2874
          %s2876 = sand.u32 %s235, 1
          %s2877 = smul.addr %s2876, 128
          %s2878 = scalar_lea.vmem [#allocation11], %s2877
          %2879 = dma.done %s2875, 2048
        $region80: #{fire_forward.1} parent=75 // pred_fallthru
          _
      $region76: #{fire_forward.1} parent=5 // pred_fallthru
        _
    $region6: #{fire_forward.1} parent=1 // loop_footer
      %s27 = sadd.s32 1, %s23
    $region7: #{fire_forward.1} parent=1 // loop_footer_branch
      %22 = sbr.rel target = $region3
    $region8: #{fire_forward.1} parent=1 // loop_exit
      _
    %2880 = vsyncpa [#allocation4], 1
    %s2881 = scalar_lea.sflag [#allocation4], 1
    %2882 = vsyncpa %s2881, 1
    %2883 = vsyncpa [#allocation7], 1
    %s2884 = scalar_lea.sflag [#allocation7], 1
    %2885 = vsyncpa %s2884, 1
    %2886 = vsyncpa [#allocation10], 1
    %2887 = vsyncpa [#allocation5], 1
    %s2888 = scalar_lea.sflag [#allocation5], 1
    %2889 = vsyncpa %s2888, 1

</llo_original>
